<compile_context>
chip_gen: v5e
topology: v5e:2x2
jax: 0.10.0
libtpu: 0.0.40
codegen_flags: <defaults>
</compile_context>

<pallas_src>
import math
import numpy as np
import jax
import jax.numpy as jnp
from jax import lax
from jax.experimental import pallas as pl
from jax.experimental.pallas import tpu as pltpu

# ----------------------------- model config ---------------------------------
B, S, D = 2, 8, 32          # batch, seq, embedding_dim
H = 4                       # num_heads
DH = D // H                 # head dim
MLP = 64                    # mlp_size
EPS = 1e-5                  # nn.LayerNorm default eps
NT = B * S                  # flattened token count
WPACK = 128                 # packed lane width (full vreg lane width)

# packed-weight buffer row offsets (all 8-aligned)
_WQKV_R, _WO_R, _W1_R, _W2_R = 0, D, 2 * D, 3 * D      # w2 rows: 3D .. 3D+MLP
# packed-vector buffer row indices
_LN1G, _LN1B, _LN2G, _LN2B, _BO, _B2, _B1, _BQKV = range(8)


def _layer_norm(x, gamma, beta):
    # Two-moment form: E[x^2] and E[x] are independent lane reductions
    # (back-to-back XLU issue) instead of reduce -> sub -> square -> reduce.
    mean = jnp.mean(x, axis=-1, keepdims=True)
    mean_sq = jnp.mean(x * x, axis=-1, keepdims=True)
    var = mean_sq - mean * mean
    return (x - mean) * lax.rsqrt(var + EPS) * gamma + beta


def _gelu_tanh(x):
    # TODO(synk): PyTorch nn.GELU() default is erf-exact; tanh approximation is
    # used for guaranteed Mosaic lowering (max abs diff ~1e-3 at these scales).
    c = math.sqrt(2.0 / math.pi)
    return 0.5 * x * (1.0 + jnp.tanh(c * (x + 0.044715 * x * x * x)))


def _softmax_last(x):
    # One batched softmax over all B*H head blocks: a single max / exp / sum /
    # reciprocal / mul instead of one per head.
    m = jnp.max(x, axis=-1, keepdims=True)
    e = jnp.exp(x - m)
    return e * pl.reciprocal(jnp.sum(e, axis=-1, keepdims=True), approx=True)


def _split_heads(t):
    # (NT, D) token-major -> (B*H, S, DH) head-major for rank-3 batched dots.
    return jnp.transpose(t.reshape(B, S, H, DH), (0, 2, 1, 3)).reshape(B * H, S, DH)


def _merge_heads(t):
    # (B*H, S, DH) head-major -> (NT, D) token-major.
    return jnp.transpose(t.reshape(B, H, S, DH), (0, 2, 1, 3)).reshape(NT, D)


# ------------------------------ Pallas kernel --------------------------------
def encoder_layer_kernel(x_ref, w_ref, v_ref, o_ref):
    x = x_ref[...]                                   # (NT, D) flattened tokens

    # ---- unpack parameters (static slices of the two packed buffers) ----
    wqkv_t = w_ref[_WQKV_R:_WQKV_R + D, :]           # (D, 128); lanes 96.. are 0
    wo_t   = w_ref[_WO_R:_WO_R + D, 0:D]             # (D, D)
    w1_t   = w_ref[_W1_R:_W1_R + D, 0:MLP]           # (D, MLP)
    w2_t   = w_ref[_W2_R:_W2_R + MLP, 0:D]           # (MLP, D)

    ln1_g = v_ref[_LN1G:_LN1G + 1, 0:D]
    ln1_b = v_ref[_LN1B:_LN1B + 1, 0:D]
    ln2_g = v_ref[_LN2G:_LN2G + 1, 0:D]
    ln2_b = v_ref[_LN2B:_LN2B + 1, 0:D]
    bo    = v_ref[_BO:_BO + 1, 0:D]
    b2    = v_ref[_B2:_B2 + 1, 0:D]
    b1    = v_ref[_B1:_B1 + 1, 0:MLP]
    bqkv  = v_ref[_BQKV:_BQKV + 1, :]                # (1, 128); lanes 96.. are 0

    # ---- LayerNorm 1 (token-flattened) ----
    xn1 = _layer_norm(x, ln1_g, ln1_b)

    # ---- QKV projection: one (NT, D) @ (D, 128) matmul (full-lane output) ----
    qkv = jnp.dot(xn1, wqkv_t, preferred_element_type=jnp.float32) + bqkv
    q = qkv[:, 0:D] * (1.0 / math.sqrt(DH))          # softmax scale folded in once
    k = qkv[:, D:2 * D]
    v = qkv[:, 2 * D:3 * D]

    # ---- self-attention, head-batched over B*H ----
    qh = _split_heads(q)                             # (B*H, S, DH)
    kh = _split_heads(k)
    vh = _split_heads(v)
    scores = jnp.einsum('bqd,bkd->bqk', qh, kh,
                        preferred_element_type=jnp.float32)   # (B*H, S, S)
    p = _softmax_last(scores)                        # one softmax for all heads
    ctx = jnp.einsum('bqk,bkd->bqd', p, vh,
                     preferred_element_type=jnp.float32)      # (B*H, S, DH)

    # head re-merge, then a SINGLE output projection
    attn_out = jnp.dot(_merge_heads(ctx), wo_t,
                       preferred_element_type=jnp.float32) + bo   # (NT, D)

    x = attn_out + x                                 # residual 1

    # ---- LayerNorm 2 + MLP (token-flattened) ----
    xn2 = _layer_norm(x, ln2_g, ln2_b)
    h1 = jnp.dot(xn2, w1_t, preferred_element_type=jnp.float32) + b1
    h1 = _gelu_tanh(h1)
    h2 = jnp.dot(h1, w2_t, preferred_element_type=jnp.float32) + b2

    o_ref[...] = (h2 + x).astype(o_ref.dtype)        # residual 2


# ------------------------------- wrapper --------------------------------------
def _pack_params(params):
    (ln1_g, ln1_b, wqkv, bqkv, wo, bo, ln2_g, ln2_b, w1, b1, w2, b2) = params
    padw = lambda a: jnp.pad(a, ((0, 0), (0, WPACK - a.shape[1])))
    # pre-transposed weight matrices, stacked into one (160, 128) slab
    w_pack = jnp.concatenate(
        [padw(wqkv.T), padw(wo.T), padw(w1.T), padw(w2.T)], axis=0)
    # LN params + biases, one 128-lane row each (order matches the _* indices)
    v_pack = jnp.concatenate(
        [padw(ln1_g), padw(ln1_b), padw(ln2_g), padw(ln2_b),
         padw(bo), padw(b2), padw(b1), padw(bqkv)], axis=0)        # (8, 128)
    return w_pack, v_pack


def encoder_layer(x, params):
    w_pack, v_pack = _pack_params(params)
    vmem = pl.BlockSpec(memory_space=pltpu.MemorySpace.VMEM)
    out = pl.pallas_call(
        encoder_layer_kernel,
        out_shape=jax.ShapeDtypeStruct((NT, D), jnp.float32),
        in_specs=[vmem, vmem, vmem],
        out_specs=vmem,
    )(x.reshape(NT, D), w_pack, v_pack)
    return out.reshape(B, S, D)


# --------------------------- pure-JAX reference --------------------------------
def encoder_layer_ref(x, params):
    (ln1_g, ln1_b, wqkv, bqkv, wo, bo, ln2_g, ln2_b, w1, b1, w2, b2) = params

    def _ln_ref(t, g, b_):
        mean = jnp.mean(t, axis=-1, keepdims=True)
        var = jnp.mean((t - mean) ** 2, axis=-1, keepdims=True)
        return (t - mean) * lax.rsqrt(var + EPS) * g + b_

    out = []
    for b in range(B):
        xb = x[b]
        xn1 = _ln_ref(xb, ln1_g, ln1_b)
        qkv = xn1 @ wqkv.T + bqkv
        q, k, v = qkv[:, :D], qkv[:, D:2 * D], qkv[:, 2 * D:]
        heads = []
        for h in range(H):
            qh = q[:, h * DH:(h + 1) * DH]
            kh = k[:, h * DH:(h + 1) * DH]
            vh = v[:, h * DH:(h + 1) * DH]
            a = jax.nn.softmax(qh @ kh.T / math.sqrt(DH), axis=-1)
            heads.append(a @ vh)
        ao = jnp.concatenate(heads, axis=-1) @ wo.T + bo
        xb = ao + xb
        xn2 = _ln_ref(xb, ln2_g, ln2_b)
        hid = _gelu_tanh(xn2 @ w1.T + b1)
        xb = hid @ w2.T + b2 + xb
        out.append(xb)
    return jnp.stack(out)


# ------------------------------- main ------------------------------------------
if __name__ == "__main__":
    key = jax.random.PRNGKey(0)
    ks = jax.random.split(key, 8)

    x = jax.random.normal(ks[0], (B, S, D), dtype=jnp.float32)

    # deterministic synthetic parameters (shapes per the module's __init__)
    ln1_g = jnp.ones((1, D), jnp.float32)
    ln1_b = jnp.zeros((1, D), jnp.float32)
    ln2_g = jnp.ones((1, D), jnp.float32)
    ln2_b = jnp.zeros((1, D), jnp.float32)
    wqkv = 0.05 * jax.random.normal(ks[1], (3 * D, D), jnp.float32)
    bqkv = 0.01 * jax.random.normal(ks[2], (1, 3 * D), jnp.float32)
    wo = 0.05 * jax.random.normal(ks[3], (D, D), jnp.float32)
    bo = 0.01 * jax.random.normal(ks[4], (1, D), jnp.float32)
    w1 = 0.05 * jax.random.normal(ks[5], (MLP, D), jnp.float32)
    b1 = 0.01 * jax.random.normal(ks[6], (1, MLP), jnp.float32)
    w2 = 0.05 * jax.random.normal(ks[7], (D, MLP), jnp.float32)
    b2 = jnp.zeros((1, D), jnp.float32)

    params = (ln1_g, ln1_b, wqkv, bqkv, wo, bo, ln2_g, ln2_b, w1, b1, w2, b2)

    out = jax.block_until_ready(encoder_layer(x, params))
    ref = encoder_layer_ref(x, params)

    assert out.shape == (B, S, D)
    assert bool(jnp.all(jnp.isfinite(out)))
    # 2e-3 tolerance: pl.reciprocal(approx=True) in the softmax denominator and
    # the two-moment LayerNorm variance are the only deviations from exact f32.
    np.testing.assert_allclose(np.asarray(out), np.asarray(ref),
                               rtol=2e-3, atol=2e-3)
    print("KERNEL_OK")
</pallas_src>

<mosaic_0001>
module attributes {stable_mosaic.version = 11 : i64} {
  func.func @encoder_layer_kernel(%arg0: memref<16x32xf32, #tpu.memory_space<vmem>>, %arg1: memref<160x128xf32, #tpu.memory_space<vmem>>, %arg2: memref<8x128xf32, #tpu.memory_space<vmem>>, %arg3: memref<16x32xf32, #tpu.memory_space<vmem>>) attributes {dimension_semantics = [], scalar_prefetch = 0 : i64, scratch_operands = 0 : i64, tpu.core_type = #tpu.core_type<tc>} {
    %c0 = arith.constant 0 : index
    %c0_0 = arith.constant 0 : index
    %0 = vector.load %arg0[%c0, %c0_0] : memref<16x32xf32, #tpu.memory_space<vmem>>, vector<16x32xf32>
    %c0_1 = arith.constant 0 : index
    %c0_2 = arith.constant 0 : index
    %1 = vector.load %arg1[%c0_1, %c0_2] : memref<160x128xf32, #tpu.memory_space<vmem>>, vector<32x128xf32>
    %c32 = arith.constant 32 : index
    %c0_3 = arith.constant 0 : index
    %2 = vector.load %arg1[%c32, %c0_3] : memref<160x128xf32, #tpu.memory_space<vmem>>, vector<32x32xf32>
    %c64 = arith.constant 64 : index
    %c0_4 = arith.constant 0 : index
    %3 = vector.load %arg1[%c64, %c0_4] : memref<160x128xf32, #tpu.memory_space<vmem>>, vector<32x64xf32>
    %c96 = arith.constant 96 : index
    %c0_5 = arith.constant 0 : index
    %4 = vector.load %arg1[%c96, %c0_5] : memref<160x128xf32, #tpu.memory_space<vmem>>, vector<64x32xf32>
    %c0_6 = arith.constant 0 : index
    %c0_7 = arith.constant 0 : index
    %5 = vector.load %arg2[%c0_6, %c0_7] : memref<8x128xf32, #tpu.memory_space<vmem>>, vector<1x32xf32>
    %c1 = arith.constant 1 : index
    %c0_8 = arith.constant 0 : index
    %6 = vector.load %arg2[%c1, %c0_8] : memref<8x128xf32, #tpu.memory_space<vmem>>, vector<1x32xf32>
    %c2 = arith.constant 2 : index
    %c0_9 = arith.constant 0 : index
    %7 = vector.load %arg2[%c2, %c0_9] : memref<8x128xf32, #tpu.memory_space<vmem>>, vector<1x32xf32>
    %c3 = arith.constant 3 : index
    %c0_10 = arith.constant 0 : index
    %8 = vector.load %arg2[%c3, %c0_10] : memref<8x128xf32, #tpu.memory_space<vmem>>, vector<1x32xf32>
    %c4 = arith.constant 4 : index
    %c0_11 = arith.constant 0 : index
    %9 = vector.load %arg2[%c4, %c0_11] : memref<8x128xf32, #tpu.memory_space<vmem>>, vector<1x32xf32>
    %c5 = arith.constant 5 : index
    %c0_12 = arith.constant 0 : index
    %10 = vector.load %arg2[%c5, %c0_12] : memref<8x128xf32, #tpu.memory_space<vmem>>, vector<1x32xf32>
    %c6 = arith.constant 6 : index
    %c0_13 = arith.constant 0 : index
    %11 = vector.load %arg2[%c6, %c0_13] : memref<8x128xf32, #tpu.memory_space<vmem>>, vector<1x64xf32>
    %c7 = arith.constant 7 : index
    %c0_14 = arith.constant 0 : index
    %12 = vector.load %arg2[%c7, %c0_14] : memref<8x128xf32, #tpu.memory_space<vmem>>, vector<1x128xf32>
    %cst = arith.constant dense<0.000000e+00> : vector<16xf32>
    %13 = vector.multi_reduction <add>, %0, %cst [1] : vector<16x32xf32> to vector<16xf32>
    %14 = vector.shape_cast %13 : vector<16xf32> to vector<16x1xf32>
    %cst_15 = arith.constant 3.200000e+01 : f32
    %15 = vector.broadcast %cst_15 : f32 to vector<16x1xf32>
    %16 = arith.divf %14, %15 : vector<16x1xf32>
    %17 = arith.mulf %0, %0 : vector<16x32xf32>
    %cst_16 = arith.constant dense<0.000000e+00> : vector<16xf32>
    %18 = vector.multi_reduction <add>, %17, %cst_16 [1] : vector<16x32xf32> to vector<16xf32>
    %19 = vector.shape_cast %18 : vector<16xf32> to vector<16x1xf32>
    %cst_17 = arith.constant 3.200000e+01 : f32
    %20 = vector.broadcast %cst_17 : f32 to vector<16x1xf32>
    %21 = arith.divf %19, %20 : vector<16x1xf32>
    %22 = arith.mulf %16, %16 : vector<16x1xf32>
    %23 = arith.subf %21, %22 : vector<16x1xf32>
    %24 = vector.broadcast %16 : vector<16x1xf32> to vector<16x32xf32>
    %25 = arith.subf %0, %24 : vector<16x32xf32>
    %cst_18 = arith.constant 9.99999974E-6 : f32
    %26 = vector.broadcast %cst_18 : f32 to vector<16x1xf32>
    %27 = arith.addf %23, %26 : vector<16x1xf32>
    %28 = math.rsqrt %27 : vector<16x1xf32>
    %29 = vector.broadcast %28 : vector<16x1xf32> to vector<16x32xf32>
    %30 = arith.mulf %25, %29 : vector<16x32xf32>
    %31 = vector.broadcast %5 : vector<1x32xf32> to vector<16x32xf32>
    %32 = arith.mulf %30, %31 : vector<16x32xf32>
    %33 = vector.broadcast %6 : vector<1x32xf32> to vector<16x32xf32>
    %34 = arith.addf %32, %33 : vector<16x32xf32>
    %cst_19 = arith.constant dense<0.000000e+00> : vector<16x128xf32>
    %35 = tpu.matmul %34, %1, %cst_19 {dimension_numbers = #tpu.dot_dimension_numbers<[1], [0], [0], [1], [0, 0, 1, 1], [], []>} : vector<16x32xf32>, vector<32x128xf32>, vector<16x128xf32> -> vector<16x128xf32>
    %36 = vector.broadcast %12 : vector<1x128xf32> to vector<16x128xf32>
    %37 = arith.addf %35, %36 : vector<16x128xf32>
    %38 = vector.extract_strided_slice %37 {offsets = [0, 0], sizes = [16, 32], strides = [1, 1]} : vector<16x128xf32> to vector<16x32xf32>
    %cst_20 = arith.constant 0.353553385 : f32
    %39 = vector.broadcast %cst_20 : f32 to vector<16x32xf32>
    %40 = arith.mulf %38, %39 : vector<16x32xf32>
    %41 = vector.extract_strided_slice %37 {offsets = [0, 32], sizes = [16, 32], strides = [1, 1]} : vector<16x128xf32> to vector<16x32xf32>
    %42 = vector.extract_strided_slice %37 {offsets = [0, 64], sizes = [16, 32], strides = [1, 1]} : vector<16x128xf32> to vector<16x32xf32>
    %43 = vector.shape_cast %40 : vector<16x32xf32> to vector<2x8x4x8xf32>
    %44 = tpu.transpose %43, [0, 2, 1, 3] : vector<2x8x4x8xf32> -> vector<2x4x8x8xf32>
    %45 = vector.shape_cast %44 : vector<2x4x8x8xf32> to vector<8x8x8xf32>
    %46 = vector.shape_cast %41 : vector<16x32xf32> to vector<2x8x4x8xf32>
    %47 = tpu.transpose %46, [0, 2, 1, 3] : vector<2x8x4x8xf32> -> vector<2x4x8x8xf32>
    %48 = vector.shape_cast %47 : vector<2x4x8x8xf32> to vector<8x8x8xf32>
    %49 = vector.shape_cast %42 : vector<16x32xf32> to vector<2x8x4x8xf32>
    %50 = tpu.transpose %49, [0, 2, 1, 3] : vector<2x8x4x8xf32> -> vector<2x4x8x8xf32>
    %51 = vector.shape_cast %50 : vector<2x4x8x8xf32> to vector<8x8x8xf32>
    "tpu.trace_start"() <{level = 10 : i32, message = "bqd,bkd->bqk"}> : () -> ()
    %cst_21 = arith.constant dense<0.000000e+00> : vector<8x8x8xf32>
    %52 = tpu.matmul %45, %48, %cst_21 {dimension_numbers = #tpu.dot_dimension_numbers<[2], [2], [1], [1], [0, 0, 0, 1, 1, 1], [0], [0]>} : vector<8x8x8xf32>, vector<8x8x8xf32>, vector<8x8x8xf32> -> vector<8x8x8xf32>
    "tpu.trace_stop"() : () -> ()
    %cst_22 = arith.constant dense<0xFF800000> : vector<8x8xf32>
    %53 = vector.multi_reduction <maximumf>, %52, %cst_22 [2] : vector<8x8x8xf32> to vector<8x8xf32>
    %54 = vector.shape_cast %53 : vector<8x8xf32> to vector<8x8x1xf32>
    %55 = vector.broadcast %54 : vector<8x8x1xf32> to vector<8x8x8xf32>
    %56 = arith.subf %52, %55 : vector<8x8x8xf32>
    %57 = math.exp %56 : vector<8x8x8xf32>
    %cst_23 = arith.constant dense<0.000000e+00> : vector<8x8xf32>
    %58 = vector.multi_reduction <add>, %57, %cst_23 [2] : vector<8x8x8xf32> to vector<8x8xf32>
    %59 = vector.shape_cast %58 : vector<8x8xf32> to vector<8x8x1xf32>
    %60 = tpu.reciprocal %59 {approx = true} : vector<8x8x1xf32> -> vector<8x8x1xf32>
    %61 = vector.broadcast %60 : vector<8x8x1xf32> to vector<8x8x8xf32>
    %62 = arith.mulf %57, %61 : vector<8x8x8xf32>
    "tpu.trace_start"() <{level = 10 : i32, message = "bqk,bkd->bqd"}> : () -> ()
    %cst_24 = arith.constant dense<0.000000e+00> : vector<8x8x8xf32>
    %63 = tpu.matmul %62, %51, %cst_24 {dimension_numbers = #tpu.dot_dimension_numbers<[2], [1], [1], [2], [0, 0, 0, 1, 1, 2], [0], [0]>} : vector<8x8x8xf32>, vector<8x8x8xf32>, vector<8x8x8xf32> -> vector<8x8x8xf32>
    "tpu.trace_stop"() : () -> ()
    %64 = vector.shape_cast %63 : vector<8x8x8xf32> to vector<2x4x8x8xf32>
    %65 = tpu.transpose %64, [0, 2, 1, 3] : vector<2x4x8x8xf32> -> vector<2x8x4x8xf32>
    %66 = vector.shape_cast %65 : vector<2x8x4x8xf32> to vector<16x32xf32>
    %cst_25 = arith.constant dense<0.000000e+00> : vector<16x32xf32>
    %67 = tpu.matmul %66, %2, %cst_25 {dimension_numbers = #tpu.dot_dimension_numbers<[1], [0], [0], [1], [0, 0, 1, 1], [], []>} : vector<16x32xf32>, vector<32x32xf32>, vector<16x32xf32> -> vector<16x32xf32>
    %68 = vector.broadcast %9 : vector<1x32xf32> to vector<16x32xf32>
    %69 = arith.addf %67, %68 : vector<16x32xf32>
    %70 = arith.addf %69, %0 : vector<16x32xf32>
    %cst_26 = arith.constant dense<0.000000e+00> : vector<16xf32>
    %71 = vector.multi_reduction <add>, %70, %cst_26 [1] : vector<16x32xf32> to vector<16xf32>
    %72 = vector.shape_cast %71 : vector<16xf32> to vector<16x1xf32>
    %cst_27 = arith.constant 3.200000e+01 : f32
    %73 = vector.broadcast %cst_27 : f32 to vector<16x1xf32>
    %74 = arith.divf %72, %73 : vector<16x1xf32>
    %75 = arith.mulf %70, %70 : vector<16x32xf32>
    %cst_28 = arith.constant dense<0.000000e+00> : vector<16xf32>
    %76 = vector.multi_reduction <add>, %75, %cst_28 [1] : vector<16x32xf32> to vector<16xf32>
    %77 = vector.shape_cast %76 : vector<16xf32> to vector<16x1xf32>
    %cst_29 = arith.constant 3.200000e+01 : f32
    %78 = vector.broadcast %cst_29 : f32 to vector<16x1xf32>
    %79 = arith.divf %77, %78 : vector<16x1xf32>
    %80 = arith.mulf %74, %74 : vector<16x1xf32>
    %81 = arith.subf %79, %80 : vector<16x1xf32>
    %82 = vector.broadcast %74 : vector<16x1xf32> to vector<16x32xf32>
    %83 = arith.subf %70, %82 : vector<16x32xf32>
    %cst_30 = arith.constant 9.99999974E-6 : f32
    %84 = vector.broadcast %cst_30 : f32 to vector<16x1xf32>
    %85 = arith.addf %81, %84 : vector<16x1xf32>
    %86 = math.rsqrt %85 : vector<16x1xf32>
    %87 = vector.broadcast %86 : vector<16x1xf32> to vector<16x32xf32>
    %88 = arith.mulf %83, %87 : vector<16x32xf32>
    %89 = vector.broadcast %7 : vector<1x32xf32> to vector<16x32xf32>
    %90 = arith.mulf %88, %89 : vector<16x32xf32>
    %91 = vector.broadcast %8 : vector<1x32xf32> to vector<16x32xf32>
    %92 = arith.addf %90, %91 : vector<16x32xf32>
    %cst_31 = arith.constant dense<0.000000e+00> : vector<16x64xf32>
    %93 = tpu.matmul %92, %3, %cst_31 {dimension_numbers = #tpu.dot_dimension_numbers<[1], [0], [0], [1], [0, 0, 1, 1], [], []>} : vector<16x32xf32>, vector<32x64xf32>, vector<16x64xf32> -> vector<16x64xf32>
    %94 = vector.broadcast %11 : vector<1x64xf32> to vector<16x64xf32>
    %95 = arith.addf %93, %94 : vector<16x64xf32>
    %cst_32 = arith.constant 5.000000e-01 : f32
    %96 = vector.broadcast %cst_32 : f32 to vector<16x64xf32>
    %97 = arith.mulf %96, %95 : vector<16x64xf32>
    %cst_33 = arith.constant 4.471500e-02 : f32
    %98 = vector.broadcast %cst_33 : f32 to vector<16x64xf32>
    %99 = arith.mulf %98, %95 : vector<16x64xf32>
    %100 = arith.mulf %99, %95 : vector<16x64xf32>
    %101 = arith.mulf %100, %95 : vector<16x64xf32>
    %102 = arith.addf %95, %101 : vector<16x64xf32>
    %cst_34 = arith.constant 0.797884583 : f32
    %103 = vector.broadcast %cst_34 : f32 to vector<16x64xf32>
    %104 = arith.mulf %103, %102 : vector<16x64xf32>
    %105 = math.tanh %104 : vector<16x64xf32>
    %cst_35 = arith.constant 1.000000e+00 : f32
    %106 = vector.broadcast %cst_35 : f32 to vector<16x64xf32>
    %107 = arith.addf %106, %105 : vector<16x64xf32>
    %108 = arith.mulf %97, %107 : vector<16x64xf32>
    %cst_36 = arith.constant dense<0.000000e+00> : vector<16x32xf32>
    %109 = tpu.matmul %108, %4, %cst_36 {dimension_numbers = #tpu.dot_dimension_numbers<[1], [0], [0], [1], [0, 0, 1, 1], [], []>} : vector<16x64xf32>, vector<64x32xf32>, vector<16x32xf32> -> vector<16x32xf32>
    %110 = vector.broadcast %10 : vector<1x32xf32> to vector<16x32xf32>
    %111 = arith.addf %109, %110 : vector<16x32xf32>
    %112 = arith.addf %111, %70 : vector<16x32xf32>
    %c0_37 = arith.constant 0 : index
    %c0_38 = arith.constant 0 : index
    %113 = vector.load %arg3[%c0_37, %c0_38] : memref<16x32xf32, #tpu.memory_space<vmem>>, vector<16x32xf32>
    tpu.vector_store %arg3[%c0_37, %c0_38], %112 {strides = array<i32>} : memref<16x32xf32, #tpu.memory_space<vmem>>, vector<16x32xf32>,
    return
  }
}

</mosaic_0001>

<llo_original>
// kernel: tpu_custom_call.1
$region0: #{tpu_custom_call.1}
  #allocation0 [shape = 'u32[]', space=smem, size = 0x4, offset = 0x4, fixed_abs, tag = 'smem constant byte address 0x4 - core index']
  #allocation1 [shape = 'u32[72,128]{1,0:T(1,128)}', space=vmem, size = 0x9000, scoped, tag = 'internal scratch']
  %s0 = inlined_call_operand.hbm [shape: f32[16,32], index: 0, kind: input, shape index: {}]
  %s1 = inlined_call_operand.hbm [shape: f32[160,128], index: 1, kind: input, shape index: {}]
  %s2 = inlined_call_operand.hbm [shape: f32[8,128], index: 2, kind: input, shape index: {}]
  %s3 = inlined_call_operand.hbm [shape: f32[16,32], index: 3, kind: output, shape index: {}]
  %s4 = sld [smem:[#allocation0]]
  $region34: #{tpu_custom_call.1} parent=0
    _
  %s6 = ssub.s32 1, %s4
  %s7 = scalar_select 0, %s6, %s4
  $region1: #{tpu_custom_call.1} parent=0
    #allocation2 [shape = 'u8[8192]{0}', space=vmem, size = 0x2000, scoped, tag = 'input window, operand 0, single buffered']
    #allocation3 [shape = 's32[1]{0}', space=sflag, size = 0x4, scoped, tag = 'scoped memory for tpu_custom_call.1']
    #allocation4 [shape = 's32[1]{0}', space=sflag, size = 0x4, scoped, tag = 'scoped memory for tpu_custom_call.1']
    #allocation5 [shape = 'u8[81920]{0}', space=vmem, size = 0x14000, scoped, tag = 'input window, operand 1, single buffered']
    #allocation6 [shape = 's32[1]{0}', space=sflag, size = 0x4, scoped, tag = 'scoped memory for tpu_custom_call.1']
    #allocation7 [shape = 'u8[4096]{0}', space=vmem, size = 0x1000, scoped, tag = 'input window, operand 2, single buffered']
    #allocation8 [shape = 'u8[8192]{0}', space=vmem, size = 0x2000, scoped, tag = 'output window, operand 0, single buffered']
    %8 = vsyncpa [#allocation3], 0
    %9 = vsyncpa [#allocation6], 0
    %10 = vsyncpa [#allocation4], 0
    // Predicated region
    $region2: #{tpu_custom_call.1} parent=1 // pred_check
      _
    $region3: #{tpu_custom_call.1} parent=1 // pred_check_branch
      %12 = sbr.rel (0) target = $region5
    $region4: #{tpu_custom_call.1} parent=1 // pred_region
      %14 = vsyncadd [#allocation3], 0
      %s15 = sshll.u32 %s0, 4
      %s16 = int_to_ptr.hbm [resolvable:$true] %s15
      %s17 = sshll.u32 [#allocation2], 4
      %s18 = int_to_ptr.vmem [resolvable:$true] %s17
      %23 = dma.hbm_to_vmem [thread:$0]  %s16, 256, %s18, [#allocation3], 128, 128, 8
    $region5: #{tpu_custom_call.1} parent=1 // pred_fallthru
      _
    // Predicated region
    $region6: #{tpu_custom_call.1} parent=1 // pred_check
      _
    $region7: #{tpu_custom_call.1} parent=1 // pred_check_branch
      %25 = sbr.rel (0) target = $region9
    $region8: #{tpu_custom_call.1} parent=1 // pred_region
      %27 = vsyncadd [#allocation6], 0
      %s28 = sshll.u32 %s1, 4
      %s29 = int_to_ptr.hbm [resolvable:$true] %s28
      %s30 = sshll.u32 [#allocation5], 4
      %s31 = int_to_ptr.vmem [resolvable:$true] %s30
      %36 = dma.hbm_to_vmem [thread:$0]  %s29, 2560, %s31, [#allocation6], 128, 128, 8
    $region9: #{tpu_custom_call.1} parent=1 // pred_fallthru
      _
    // Predicated region
    $region10: #{tpu_custom_call.1} parent=1 // pred_check
      _
    $region11: #{tpu_custom_call.1} parent=1 // pred_check_branch
      %38 = sbr.rel (0) target = $region13
    $region12: #{tpu_custom_call.1} parent=1 // pred_region
      %40 = vsyncadd [#allocation6], 0
      %s42 = sshll.u32 %s2, 4
      %s43 = int_to_ptr.hbm [resolvable:$true] %s42
      %s44 = sshll.u32 [#allocation7], 4
      %s45 = int_to_ptr.vmem [resolvable:$true] %s44
      %47 = dma.hbm_to_vmem [thread:$0]  %s43, 128, %s45, [#allocation6]
    $region13: #{tpu_custom_call.1} parent=1 // pred_fallthru
      _
    // Predicated region
    $region14: #{tpu_custom_call.1} parent=1 // pred_check
      _
    $region15: #{tpu_custom_call.1} parent=1 // pred_check_branch
      %49 = sbr.rel (0) target = $region17
    $region16: #{tpu_custom_call.1} parent=1 // pred_region
      %51 = dma.done [#allocation3], 256
    $region17: #{tpu_custom_call.1} parent=1 // pred_fallthru
      _
    // Predicated region
    $region18: #{tpu_custom_call.1} parent=1 // pred_check
      _
    $region19: #{tpu_custom_call.1} parent=1 // pred_check_branch
      %53 = sbr.rel (0) target = $region21
    $region20: #{tpu_custom_call.1} parent=1 // pred_region
      %55 = dma.done [#allocation6], 2560
    $region21: #{tpu_custom_call.1} parent=1 // pred_fallthru
      _
    // Predicated region
    $region22: #{tpu_custom_call.1} parent=1 // pred_check
      _
    $region23: #{tpu_custom_call.1} parent=1 // pred_check_branch
      %57 = sbr.rel (0) target = $region25
    $region24: #{tpu_custom_call.1} parent=1 // pred_region
      %59 = dma.done [#allocation6], 128
    $region25: #{tpu_custom_call.1} parent=1 // pred_fallthru
      _
    %v60 = vld [vmem:[#allocation2] sm:$0xff]
    %v61 = vld [vmem:[#allocation2 + $0x8] sm:$0xff]
    %v62 = vld [vmem:[#allocation5] sm:$0xff]
    %v63 = vld [vmem:[#allocation5 + $0x8] sm:$0xff]
    %v64 = vld [vmem:[#allocation5 + $0x10] sm:$0xff]
    %v65 = vld [vmem:[#allocation5 + $0x18] sm:$0xff]
    %v66 = vld [vmem:[#allocation5 + $0x20] sm:$0xff]
    %v67 = vld [vmem:[#allocation5 + $0x28] sm:$0xff]
    %v68 = vld [vmem:[#allocation5 + $0x30] sm:$0xff]
    %v69 = vld [vmem:[#allocation5 + $0x38] sm:$0xff]
    %v70 = vld [vmem:[#allocation5 + $0x40] sm:$0xff]
    %v71 = vld [vmem:[#allocation5 + $0x48] sm:$0xff]
    %v72 = vld [vmem:[#allocation5 + $0x50] sm:$0xff]
    %v73 = vld [vmem:[#allocation5 + $0x58] sm:$0xff]
    %v74 = vld [vmem:[#allocation5 + $0x60] sm:$0xff]
    %v75 = vld [vmem:[#allocation5 + $0x68] sm:$0xff]
    %v76 = vld [vmem:[#allocation5 + $0x70] sm:$0xff]
    %v77 = vld [vmem:[#allocation5 + $0x78] sm:$0xff]
    %v78 = vld [vmem:[#allocation5 + $0x80] sm:$0xff]
    %v79 = vld [vmem:[#allocation5 + $0x88] sm:$0xff]
    %v80 = vld [vmem:[#allocation5 + $0x90] sm:$0xff]
    %v81 = vld [vmem:[#allocation5 + $0x98] sm:$0xff]
    %v82 = vld [vmem:[#allocation7] sm:$0x1]
    %v83 = vld [vmem:[#allocation7 + $0x1] sm:$0x1]
    %v84 = vld [vmem:[#allocation7 + $0x2] sm:$0x1]
    %v85 = vld [vmem:[#allocation7 + $0x3] sm:$0x1]
    %v86 = vld [vmem:[#allocation7 + $0x4] sm:$0x1]
    %v87 = vld [vmem:[#allocation7 + $0x5] sm:$0x1]
    %v88 = vld [vmem:[#allocation7 + $0x6] sm:$0x1]
    %v89 = vld [vmem:[#allocation7 + $0x7] sm:$0x1]
    %vm90 = vcmask 261120
    %v91 = vsel %vm90, %v60, 0.0
    %92 = vadd.xlane.f32.xlu0 %v91
    %v93 = vpop.xlane.xlu0 %92
    %v94 = vsel %vm90, %v61, 0.0
    %95 = vadd.xlane.f32.xlu0 %v94
    %v96 = vpop.xlane.xlu0 %95
    %v97 = vrcp.pop 32.0
    %v98 = vmul.f32 32.0, %v97
    %v99 = vsub.f32 1.0, %v98
    %v100 = vmul.f32 %v97, %v99
    %v101 = vadd.f32 %v97, %v100
    %vm102 = vweird.f32 %v97
    %v103 = vsel %vm102, %v97, %v101
    %v104 = vmul.f32 %v93, %v103
    %v105 = vmul.f32 %v96, %v103
    %v106 = vmul.f32 %v60, %v60
    %v107 = vmul.f32 %v61, %v61
    %v108 = vsel %vm90, %v106, 0.0
    %109 = vadd.xlane.f32.xlu0 %v108
    %v110 = vpop.xlane.xlu0 %109
    %v111 = vsel %vm90, %v107, 0.0
    %112 = vadd.xlane.f32.xlu0 %v111
    %v113 = vpop.xlane.xlu0 %112
    %v114 = vmul.f32 %v110, %v103
    %v115 = vmul.f32 %v113, %v103
    %v116 = vmul.f32 %v104, %v104
    %v117 = vmul.f32 %v105, %v105
    %v118 = vsub.f32 %v114, %v116
    %v119 = vsub.f32 %v115, %v117
    %v120 = vsub.f32 %v60, %v104
    %v121 = vsub.f32 %v61, %v105
    %v122 = vadd.f32 %v118, 1e-05
    %v123 = vadd.f32 %v119, 1e-05
    %v124 = vrsqrt.pop %v122
    %v125 = vmul.f32 %v124, %v122
    %v126 = vmul.f32 %v125, %v124
    %v127 = vmul.f32 0.5, %v126
    %v128 = vsub.f32 1.5, %v127
    %v129 = vmul.f32 %v124, %v128
    %vm130 = vweird.f32 %v122
    %vm131 = vweird.f32 %v124
    %vm132 = vmor %vm130, %vm131
    %v133 = vsel %vm132, %v124, %v129
    %v134 = vrsqrt.pop %v123
    %v135 = vmul.f32 %v134, %v123
    %v136 = vmul.f32 %v135, %v134
    %v137 = vmul.f32 0.5, %v136
    %v138 = vsub.f32 1.5, %v137
    %v139 = vmul.f32 %v134, %v138
    %vm140 = vweird.f32 %v123
    %vm141 = vweird.f32 %v134
    %vm142 = vmor %vm140, %vm141
    %v143 = vsel %vm142, %v134, %v139
    %v144 = vmul.f32 %v120, %v133
    %v145 = vmul.f32 %v121, %v143
    %v146 = vperm.slane %v82, 0
    %v147 = vmul.f32 %v144, %v146
    %v148 = vmul.f32 %v145, %v146
    %v149 = vperm.slane %v83, 0
    %v150 = vadd.f32 %v147, %v149
    %v151 = vadd.f32 %v148, %v149
    %v152 = vperm.slane %v89, 0
    %v154 = vsel %vm90, %v150, 0
    %v157 = vsel %vm90, %v151, 0
    %159 = vmatpush.msra.mxu0 0.0
    %160 = vmatpush.msra.mxu0 0.0
    %161 = vmatpush.msra.mxu0 0.0
    %162 = vmatpush.msra.mxu0 0.0
    %163 = vmatpush.msra.mxu0 0.0
    %164 = vmatpush.msra.mxu0 0.0
    %165 = vmatpush.msra.mxu0 0.0
    %166 = vmatpush.msra.mxu0 0.0
    %167 = vmatpush.msra.mxu0 0.0
    %168 = vmatpush.msra.mxu0 0.0
    %169 = vmatpush.msra.mxu0 0.0
    %170 = vmatpush.msra.mxu0 0.0
    %171 = vmatpush.msra.mxu0 %v65
    %172 = vmatpush.msra.mxu0 %v64
    %173 = vmatpush.msra.mxu0 %v63
    %174 = vmatpush.msra.mxu0 %v62
    %175 = vmatmul.f32.gmra.mxu0 %v154
    %v176 = vpop.f32.mrf.mxu0
    %v177 = vadd.f32 %v152, %v176
    %178 = vmatmul.f32.gmra.mxu0 %v157
    %v179 = vpop.f32.mrf.mxu0
    %v180 = vadd.f32 %v152, %v179
    %181 = vdwg.mxu0
    %v182 = vmul.f32 %v177, 0.35355338
    %v183 = vmul.f32 %v180, 0.35355338
    %186 = vrot.lane.b32.xlu0 %v182, 120
    %v187 = vpop.permute.xlu0 %186
    %188 = vrot.lane.b32.xlu0 %v183, 120
    %v189 = vpop.permute.xlu0 %188
    %192 = vrot.lane.b32.xlu0 %v182, 112
    %v193 = vpop.permute.xlu0 %192
    %194 = vrot.lane.b32.xlu0 %v183, 112
    %v195 = vpop.permute.xlu0 %194
    %198 = vrot.lane.b32.xlu0 %v182, 104
    %v199 = vpop.permute.xlu0 %198
    %200 = vrot.lane.b32.xlu0 %v183, 104
    %v201 = vpop.permute.xlu0 %200
    %v204 = vrot.slane %v193, 4
    %vm205 = vcmask 1047556
    %v206 = vsel %vm205, %v204, %v182
    %v207 = vrot.slane %v182, 4
    %v208 = vsel %vm205, %v193, %v207
    %v210 = vunpack.c.l.s4 1983009808
    %v211 = vunpack.c.0.s8 %v210
    %v212 = vperm.slane %v206, %v211
    %v214 = vunpack.c.l.s4 1983009808
    %v215 = vunpack.c.0.s8 %v214
    %v216 = vperm.slane %v208, %v215
    %v217 = vrot.slane %v199, 4
    %v218 = vsel %vm205, %v217, %v187
    %v219 = vrot.slane %v187, 4
    %v220 = vsel %vm205, %v199, %v219
    %v222 = vunpack.c.l.s4 1983009808
    %v223 = vunpack.c.0.s8 %v222
    %v224 = vperm.slane %v218, %v223
    %v226 = vunpack.c.l.s4 1983009808
    %v227 = vunpack.c.0.s8 %v226
    %v228 = vperm.slane %v220, %v227
    %v229 = vrot.slane %v224, 4
    %v230 = vsel %vm205, %v229, %v212
    %v231 = vrot.slane %v212, 4
    %v232 = vsel %vm205, %v224, %v231
    %v234 = vunpack.c.l.s4 1934713408
    %v235 = vunpack.c.0.s8 %v234
    %v236 = vperm.slane %v230, %v235
    %v238 = vunpack.c.l.s4 1934713408
    %v239 = vunpack.c.0.s8 %v238
    %v240 = vperm.slane %v232, %v239
    %v241 = vrot.slane %v228, 4
    %v242 = vsel %vm205, %v241, %v216
    %v243 = vrot.slane %v216, 4
    %v244 = vsel %vm205, %v228, %v243
    %v246 = vunpack.c.l.s4 1934713408
    %v247 = vunpack.c.0.s8 %v246
    %v248 = vperm.slane %v242, %v247
    %v250 = vunpack.c.l.s4 1934713408
    %v251 = vunpack.c.0.s8 %v250
    %v252 = vperm.slane %v244, %v251
    %v253 = vrot.slane %v236, 4
    %v254 = vsel %vm205, 0.0, %v253
    %v255 = vrot.slane %v240, 4
    %v256 = vsel %vm205, 0.0, %v255
    %v257 = vrot.slane %v248, 4
    %v258 = vsel %vm205, 0.0, %v257
    %v259 = vrot.slane %v252, 4
    %v260 = vsel %vm205, 0.0, %v259
    %v261 = vrot.slane %v195, 4
    %v262 = vsel %vm205, %v261, %v183
    %v263 = vrot.slane %v183, 4
    %v264 = vsel %vm205, %v195, %v263
    %v266 = vunpack.c.l.s4 1983009808
    %v267 = vunpack.c.0.s8 %v266
    %v268 = vperm.slane %v262, %v267
    %v270 = vunpack.c.l.s4 1983009808
    %v271 = vunpack.c.0.s8 %v270
    %v272 = vperm.slane %v264, %v271
    %v273 = vrot.slane %v201, 4
    %v274 = vsel %vm205, %v273, %v189
    %v275 = vrot.slane %v189, 4
    %v276 = vsel %vm205, %v201, %v275
    %v278 = vunpack.c.l.s4 1983009808
    %v279 = vunpack.c.0.s8 %v278
    %v280 = vperm.slane %v274, %v279
    %v282 = vunpack.c.l.s4 1983009808
    %v283 = vunpack.c.0.s8 %v282
    %v284 = vperm.slane %v276, %v283
    %v285 = vrot.slane %v280, 4
    %v286 = vsel %vm205, %v285, %v268
    %v287 = vrot.slane %v268, 4
    %v288 = vsel %vm205, %v280, %v287
    %v290 = vunpack.c.l.s4 1934713408
    %v291 = vunpack.c.0.s8 %v290
    %v292 = vperm.slane %v286, %v291
    %v294 = vunpack.c.l.s4 1934713408
    %v295 = vunpack.c.0.s8 %v294
    %v296 = vperm.slane %v288, %v295
    %v297 = vrot.slane %v284, 4
    %v298 = vsel %vm205, %v297, %v272
    %v299 = vrot.slane %v272, 4
    %v300 = vsel %vm205, %v284, %v299
    %v302 = vunpack.c.l.s4 1934713408
    %v303 = vunpack.c.0.s8 %v302
    %v304 = vperm.slane %v298, %v303
    %v306 = vunpack.c.l.s4 1934713408
    %v307 = vunpack.c.0.s8 %v306
    %v308 = vperm.slane %v300, %v307
    %v309 = vrot.slane %v292, 4
    %v310 = vsel %vm205, 0.0, %v309
    %v311 = vrot.slane %v296, 4
    %v312 = vsel %vm205, 0.0, %v311
    %v313 = vrot.slane %v304, 4
    %v314 = vsel %vm205, 0.0, %v313
    %v315 = vrot.slane %v308, 4
    %v316 = vsel %vm205, 0.0, %v315
    %v317 = vsel %vm205, %v255, %v236
    %v319 = vunpack.c.l.s4 1983009808
    %v320 = vunpack.c.0.s8 %v319
    %v321 = vperm.slane %v317, %v320
    %v322 = vrot.slane %v256, 4
    %v323 = vsel %vm205, %v322, %v254
    %v325 = vunpack.c.l.s4 1983009808
    %v326 = vunpack.c.0.s8 %v325
    %v327 = vperm.slane %v323, %v326
    %v328 = vsel %vm205, %v259, %v248
    %v330 = vunpack.c.l.s4 1983009808
    %v331 = vunpack.c.0.s8 %v330
    %v332 = vperm.slane %v328, %v331
    %v333 = vrot.slane %v260, 4
    %v334 = vsel %vm205, %v333, %v258
    %v336 = vunpack.c.l.s4 1983009808
    %v337 = vunpack.c.0.s8 %v336
    %v338 = vperm.slane %v334, %v337
    %v339 = vrot.slane %v327, 4
    %v340 = vsel %vm205, %v339, %v321
    %v341 = vrot.slane %v321, 4
    %v342 = vsel %vm205, %v327, %v341
    %v344 = vunpack.c.l.s4 1934713408
    %v345 = vunpack.c.0.s8 %v344
    %v346 = vperm.slane %v340, %v345
    %v348 = vunpack.c.l.s4 1934713408
    %v349 = vunpack.c.0.s8 %v348
    %v350 = vperm.slane %v342, %v349
    %v351 = vrot.slane %v338, 4
    %v352 = vsel %vm205, %v351, %v332
    %v353 = vrot.slane %v332, 4
    %v354 = vsel %vm205, %v338, %v353
    %v356 = vunpack.c.l.s4 1934713408
    %v357 = vunpack.c.0.s8 %v356
    %v358 = vperm.slane %v352, %v357
    %v360 = vunpack.c.l.s4 1934713408
    %v361 = vunpack.c.0.s8 %v360
    %v362 = vperm.slane %v354, %v361
    %v363 = vrot.slane %v358, 4
    %v364 = vsel %vm205, %v363, %v346
    %v365 = vrot.slane %v346, 4
    %v366 = vsel %vm205, %v358, %v365
    %v367 = vrot.slane %v362, 4
    %v368 = vsel %vm205, %v367, %v350
    %v369 = vrot.slane %v350, 4
    %v370 = vsel %vm205, %v362, %v369
    %v371 = vsel %vm205, %v311, %v292
    %v373 = vunpack.c.l.s4 1983009808
    %v374 = vunpack.c.0.s8 %v373
    %v375 = vperm.slane %v371, %v374
    %v376 = vrot.slane %v312, 4
    %v377 = vsel %vm205, %v376, %v310
    %v379 = vunpack.c.l.s4 1983009808
    %v380 = vunpack.c.0.s8 %v379
    %v381 = vperm.slane %v377, %v380
    %v382 = vsel %vm205, %v315, %v304
    %v384 = vunpack.c.l.s4 1983009808
    %v385 = vunpack.c.0.s8 %v384
    %v386 = vperm.slane %v382, %v385
    %v387 = vrot.slane %v316, 4
    %v388 = vsel %vm205, %v387, %v314
    %v390 = vunpack.c.l.s4 1983009808
    %v391 = vunpack.c.0.s8 %v390
    %v392 = vperm.slane %v388, %v391
    %v393 = vrot.slane %v381, 4
    %v394 = vsel %vm205, %v393, %v375
    %v395 = vrot.slane %v375, 4
    %v396 = vsel %vm205, %v381, %v395
    %v398 = vunpack.c.l.s4 1934713408
    %v399 = vunpack.c.0.s8 %v398
    %v400 = vperm.slane %v394, %v399
    %v402 = vunpack.c.l.s4 1934713408
    %v403 = vunpack.c.0.s8 %v402
    %v404 = vperm.slane %v396, %v403
    %v405 = vrot.slane %v392, 4
    %v406 = vsel %vm205, %v405, %v386
    %v407 = vrot.slane %v386, 4
    %v408 = vsel %vm205, %v392, %v407
    %v410 = vunpack.c.l.s4 1934713408
    %v411 = vunpack.c.0.s8 %v410
    %v412 = vperm.slane %v406, %v411
    %v414 = vunpack.c.l.s4 1934713408
    %v415 = vunpack.c.0.s8 %v414
    %v416 = vperm.slane %v408, %v415
    %v417 = vrot.slane %v412, 4
    %v418 = vsel %vm205, %v417, %v400
    %v419 = vrot.slane %v400, 4
    %v420 = vsel %vm205, %v412, %v419
    %v421 = vrot.slane %v416, 4
    %v422 = vsel %vm205, %v421, %v404
    %v423 = vrot.slane %v404, 4
    %v424 = vsel %vm205, %v416, %v423
    %427 = vrot.lane.b32.xlu0 %v177, 120
    %v428 = vpop.permute.xlu0 %427
    %429 = vrot.lane.b32.xlu0 %v180, 120
    %v430 = vpop.permute.xlu0 %429
    %431 = vrot.lane.b32.xlu0 %v177, 112
    %v432 = vpop.permute.xlu0 %431
    %433 = vrot.lane.b32.xlu0 %v180, 112
    %v434 = vpop.permute.xlu0 %433
    %435 = vrot.lane.b32.xlu0 %v177, 104
    %v436 = vpop.permute.xlu0 %435
    %437 = vrot.lane.b32.xlu0 %v180, 104
    %v438 = vpop.permute.xlu0 %437
    %439 = vrot.lane.b32.xlu0 %v177, 96
    %v440 = vpop.permute.xlu0 %439
    %441 = vrot.lane.b32.xlu0 %v180, 96
    %v442 = vpop.permute.xlu0 %441
    %443 = vrot.lane.b32.xlu0 %v428, 96
    %v444 = vpop.permute.xlu0 %443
    %445 = vrot.lane.b32.xlu0 %v430, 96
    %v446 = vpop.permute.xlu0 %445
    %447 = vrot.lane.b32.xlu0 %v432, 96
    %v448 = vpop.permute.xlu0 %447
    %449 = vrot.lane.b32.xlu0 %v434, 96
    %v450 = vpop.permute.xlu0 %449
    %451 = vrot.lane.b32.xlu0 %v436, 96
    %v452 = vpop.permute.xlu0 %451
    %453 = vrot.lane.b32.xlu0 %v438, 96
    %v454 = vpop.permute.xlu0 %453
    %v463 = vrot.slane %v448, 4
    %v464 = vsel %vm205, %v463, %v440
    %v465 = vrot.slane %v440, 4
    %v466 = vsel %vm205, %v448, %v465
    %v468 = vunpack.c.l.s4 1983009808
    %v469 = vunpack.c.0.s8 %v468
    %v470 = vperm.slane %v464, %v469
    %v472 = vunpack.c.l.s4 1983009808
    %v473 = vunpack.c.0.s8 %v472
    %v474 = vperm.slane %v466, %v473
    %v475 = vrot.slane %v452, 4
    %v476 = vsel %vm205, %v475, %v444
    %v477 = vrot.slane %v444, 4
    %v478 = vsel %vm205, %v452, %v477
    %v480 = vunpack.c.l.s4 1983009808
    %v481 = vunpack.c.0.s8 %v480
    %v482 = vperm.slane %v476, %v481
    %v484 = vunpack.c.l.s4 1983009808
    %v485 = vunpack.c.0.s8 %v484
    %v486 = vperm.slane %v478, %v485
    %v487 = vrot.slane %v482, 4
    %v488 = vsel %vm205, %v487, %v470
    %v489 = vrot.slane %v470, 4
    %v490 = vsel %vm205, %v482, %v489
    %v492 = vunpack.c.l.s4 1934713408
    %v493 = vunpack.c.0.s8 %v492
    %v494 = vperm.slane %v488, %v493
    %v496 = vunpack.c.l.s4 1934713408
    %v497 = vunpack.c.0.s8 %v496
    %v498 = vperm.slane %v490, %v497
    %v499 = vrot.slane %v486, 4
    %v500 = vsel %vm205, %v499, %v474
    %v501 = vrot.slane %v474, 4
    %v502 = vsel %vm205, %v486, %v501
    %v504 = vunpack.c.l.s4 1934713408
    %v505 = vunpack.c.0.s8 %v504
    %v506 = vperm.slane %v500, %v505
    %v508 = vunpack.c.l.s4 1934713408
    %v509 = vunpack.c.0.s8 %v508
    %v510 = vperm.slane %v502, %v509
    %v511 = vrot.slane %v494, 4
    %v512 = vsel %vm205, 0.0, %v511
    %v513 = vrot.slane %v498, 4
    %v514 = vsel %vm205, 0.0, %v513
    %v515 = vrot.slane %v506, 4
    %v516 = vsel %vm205, 0.0, %v515
    %v517 = vrot.slane %v510, 4
    %v518 = vsel %vm205, 0.0, %v517
    %v519 = vrot.slane %v450, 4
    %v520 = vsel %vm205, %v519, %v442
    %v521 = vrot.slane %v442, 4
    %v522 = vsel %vm205, %v450, %v521
    %v524 = vunpack.c.l.s4 1983009808
    %v525 = vunpack.c.0.s8 %v524
    %v526 = vperm.slane %v520, %v525
    %v528 = vunpack.c.l.s4 1983009808
    %v529 = vunpack.c.0.s8 %v528
    %v530 = vperm.slane %v522, %v529
    %v531 = vrot.slane %v454, 4
    %v532 = vsel %vm205, %v531, %v446
    %v533 = vrot.slane %v446, 4
    %v534 = vsel %vm205, %v454, %v533
    %v536 = vunpack.c.l.s4 1983009808
    %v537 = vunpack.c.0.s8 %v536
    %v538 = vperm.slane %v532, %v537
    %v540 = vunpack.c.l.s4 1983009808
    %v541 = vunpack.c.0.s8 %v540
    %v542 = vperm.slane %v534, %v541
    %v543 = vrot.slane %v538, 4
    %v544 = vsel %vm205, %v543, %v526
    %v545 = vrot.slane %v526, 4
    %v546 = vsel %vm205, %v538, %v545
    %v548 = vunpack.c.l.s4 1934713408
    %v549 = vunpack.c.0.s8 %v548
    %v550 = vperm.slane %v544, %v549
    %v552 = vunpack.c.l.s4 1934713408
    %v553 = vunpack.c.0.s8 %v552
    %v554 = vperm.slane %v546, %v553
    %v555 = vrot.slane %v542, 4
    %v556 = vsel %vm205, %v555, %v530
    %v557 = vrot.slane %v530, 4
    %v558 = vsel %vm205, %v542, %v557
    %v560 = vunpack.c.l.s4 1934713408
    %v561 = vunpack.c.0.s8 %v560
    %v562 = vperm.slane %v556, %v561
    %v564 = vunpack.c.l.s4 1934713408
    %v565 = vunpack.c.0.s8 %v564
    %v566 = vperm.slane %v558, %v565
    %v567 = vrot.slane %v550, 4
    %v568 = vsel %vm205, 0.0, %v567
    %v569 = vrot.slane %v554, 4
    %v570 = vsel %vm205, 0.0, %v569
    %v571 = vrot.slane %v562, 4
    %v572 = vsel %vm205, 0.0, %v571
    %v573 = vrot.slane %v566, 4
    %v574 = vsel %vm205, 0.0, %v573
    %v575 = vsel %vm205, %v513, %v494
    %v577 = vunpack.c.l.s4 1983009808
    %v578 = vunpack.c.0.s8 %v577
    %v579 = vperm.slane %v575, %v578
    %v580 = vrot.slane %v514, 4
    %v581 = vsel %vm205, %v580, %v512
    %v583 = vunpack.c.l.s4 1983009808
    %v584 = vunpack.c.0.s8 %v583
    %v585 = vperm.slane %v581, %v584
    %v586 = vsel %vm205, %v517, %v506
    %v588 = vunpack.c.l.s4 1983009808
    %v589 = vunpack.c.0.s8 %v588
    %v590 = vperm.slane %v586, %v589
    %v591 = vrot.slane %v518, 4
    %v592 = vsel %vm205, %v591, %v516
    %v594 = vunpack.c.l.s4 1983009808
    %v595 = vunpack.c.0.s8 %v594
    %v596 = vperm.slane %v592, %v595
    %v597 = vrot.slane %v585, 4
    %v598 = vsel %vm205, %v597, %v579
    %v599 = vrot.slane %v579, 4
    %v600 = vsel %vm205, %v585, %v599
    %v602 = vunpack.c.l.s4 1934713408
    %v603 = vunpack.c.0.s8 %v602
    %v604 = vperm.slane %v598, %v603
    %v606 = vunpack.c.l.s4 1934713408
    %v607 = vunpack.c.0.s8 %v606
    %v608 = vperm.slane %v600, %v607
    %v609 = vrot.slane %v596, 4
    %v610 = vsel %vm205, %v609, %v590
    %v611 = vrot.slane %v590, 4
    %v612 = vsel %vm205, %v596, %v611
    %v614 = vunpack.c.l.s4 1934713408
    %v615 = vunpack.c.0.s8 %v614
    %v616 = vperm.slane %v610, %v615
    %v618 = vunpack.c.l.s4 1934713408
    %v619 = vunpack.c.0.s8 %v618
    %v620 = vperm.slane %v612, %v619
    %v621 = vrot.slane %v616, 4
    %v622 = vsel %vm205, %v621, %v604
    %v623 = vrot.slane %v604, 4
    %v624 = vsel %vm205, %v616, %v623
    %v625 = vrot.slane %v620, 4
    %v626 = vsel %vm205, %v625, %v608
    %v627 = vrot.slane %v608, 4
    %v628 = vsel %vm205, %v620, %v627
    %v629 = vsel %vm205, %v569, %v550
    %v631 = vunpack.c.l.s4 1983009808
    %v632 = vunpack.c.0.s8 %v631
    %v633 = vperm.slane %v629, %v632
    %v634 = vrot.slane %v570, 4
    %v635 = vsel %vm205, %v634, %v568
    %v637 = vunpack.c.l.s4 1983009808
    %v638 = vunpack.c.0.s8 %v637
    %v639 = vperm.slane %v635, %v638
    %v640 = vsel %vm205, %v573, %v562
    %v642 = vunpack.c.l.s4 1983009808
    %v643 = vunpack.c.0.s8 %v642
    %v644 = vperm.slane %v640, %v643
    %v645 = vrot.slane %v574, 4
    %v646 = vsel %vm205, %v645, %v572
    %v648 = vunpack.c.l.s4 1983009808
    %v649 = vunpack.c.0.s8 %v648
    %v650 = vperm.slane %v646, %v649
    %v651 = vrot.slane %v639, 4
    %v652 = vsel %vm205, %v651, %v633
    %v653 = vrot.slane %v633, 4
    %v654 = vsel %vm205, %v639, %v653
    %v656 = vunpack.c.l.s4 1934713408
    %v657 = vunpack.c.0.s8 %v656
    %v658 = vperm.slane %v652, %v657
    %v660 = vunpack.c.l.s4 1934713408
    %v661 = vunpack.c.0.s8 %v660
    %v662 = vperm.slane %v654, %v661
    %v663 = vrot.slane %v650, 4
    %v664 = vsel %vm205, %v663, %v644
    %v665 = vrot.slane %v644, 4
    %v666 = vsel %vm205, %v650, %v665
    %v668 = vunpack.c.l.s4 1934713408
    %v669 = vunpack.c.0.s8 %v668
    %v670 = vperm.slane %v664, %v669
    %v672 = vunpack.c.l.s4 1934713408
    %v673 = vunpack.c.0.s8 %v672
    %v674 = vperm.slane %v666, %v673
    %v675 = vrot.slane %v670, 4
    %v676 = vsel %vm205, %v675, %v658
    %v677 = vrot.slane %v658, 4
    %v678 = vsel %vm205, %v670, %v677
    %v679 = vrot.slane %v674, 4
    %v680 = vsel %vm205, %v679, %v662
    %v681 = vrot.slane %v662, 4
    %v682 = vsel %vm205, %v674, %v681
    %683 = vrot.lane.b32.xlu0 %v177, 64
    %v684 = vpop.permute.xlu0 %683
    %685 = vrot.lane.b32.xlu0 %v180, 64
    %v686 = vpop.permute.xlu0 %685
    %687 = vrot.lane.b32.xlu0 %v428, 64
    %v688 = vpop.permute.xlu0 %687
    %689 = vrot.lane.b32.xlu0 %v430, 64
    %v690 = vpop.permute.xlu0 %689
    %691 = vrot.lane.b32.xlu0 %v432, 64
    %v692 = vpop.permute.xlu0 %691
    %693 = vrot.lane.b32.xlu0 %v434, 64
    %v694 = vpop.permute.xlu0 %693
    %695 = vrot.lane.b32.xlu0 %v436, 64
    %v696 = vpop.permute.xlu0 %695
    %697 = vrot.lane.b32.xlu0 %v438, 64
    %v698 = vpop.permute.xlu0 %697
    %v707 = vrot.slane %v692, 4
    %v708 = vsel %vm205, %v707, %v684
    %v709 = vrot.slane %v684, 4
    %v710 = vsel %vm205, %v692, %v709
    %v712 = vunpack.c.l.s4 1983009808
    %v713 = vunpack.c.0.s8 %v712
    %v714 = vperm.slane %v708, %v713
    %v716 = vunpack.c.l.s4 1983009808
    %v717 = vunpack.c.0.s8 %v716
    %v718 = vperm.slane %v710, %v717
    %v719 = vrot.slane %v696, 4
    %v720 = vsel %vm205, %v719, %v688
    %v721 = vrot.slane %v688, 4
    %v722 = vsel %vm205, %v696, %v721
    %v724 = vunpack.c.l.s4 1983009808
    %v725 = vunpack.c.0.s8 %v724
    %v726 = vperm.slane %v720, %v725
    %v728 = vunpack.c.l.s4 1983009808
    %v729 = vunpack.c.0.s8 %v728
    %v730 = vperm.slane %v722, %v729
    %v731 = vrot.slane %v726, 4
    %v732 = vsel %vm205, %v731, %v714
    %v733 = vrot.slane %v714, 4
    %v734 = vsel %vm205, %v726, %v733
    %v736 = vunpack.c.l.s4 1934713408
    %v737 = vunpack.c.0.s8 %v736
    %v738 = vperm.slane %v732, %v737
    %v740 = vunpack.c.l.s4 1934713408
    %v741 = vunpack.c.0.s8 %v740
    %v742 = vperm.slane %v734, %v741
    %v743 = vrot.slane %v730, 4
    %v744 = vsel %vm205, %v743, %v718
    %v745 = vrot.slane %v718, 4
    %v746 = vsel %vm205, %v730, %v745
    %v748 = vunpack.c.l.s4 1934713408
    %v749 = vunpack.c.0.s8 %v748
    %v750 = vperm.slane %v744, %v749
    %v752 = vunpack.c.l.s4 1934713408
    %v753 = vunpack.c.0.s8 %v752
    %v754 = vperm.slane %v746, %v753
    %v755 = vrot.slane %v738, 4
    %v756 = vsel %vm205, 0.0, %v755
    %v757 = vrot.slane %v742, 4
    %v758 = vsel %vm205, 0.0, %v757
    %v759 = vrot.slane %v750, 4
    %v760 = vsel %vm205, 0.0, %v759
    %v761 = vrot.slane %v754, 4
    %v762 = vsel %vm205, 0.0, %v761
    %v763 = vrot.slane %v694, 4
    %v764 = vsel %vm205, %v763, %v686
    %v765 = vrot.slane %v686, 4
    %v766 = vsel %vm205, %v694, %v765
    %v768 = vunpack.c.l.s4 1983009808
    %v769 = vunpack.c.0.s8 %v768
    %v770 = vperm.slane %v764, %v769
    %v772 = vunpack.c.l.s4 1983009808
    %v773 = vunpack.c.0.s8 %v772
    %v774 = vperm.slane %v766, %v773
    %v775 = vrot.slane %v698, 4
    %v776 = vsel %vm205, %v775, %v690
    %v777 = vrot.slane %v690, 4
    %v778 = vsel %vm205, %v698, %v777
    %v780 = vunpack.c.l.s4 1983009808
    %v781 = vunpack.c.0.s8 %v780
    %v782 = vperm.slane %v776, %v781
    %v784 = vunpack.c.l.s4 1983009808
    %v785 = vunpack.c.0.s8 %v784
    %v786 = vperm.slane %v778, %v785
    %v787 = vrot.slane %v782, 4
    %v788 = vsel %vm205, %v787, %v770
    %v789 = vrot.slane %v770, 4
    %v790 = vsel %vm205, %v782, %v789
    %v792 = vunpack.c.l.s4 1934713408
    %v793 = vunpack.c.0.s8 %v792
    %v794 = vperm.slane %v788, %v793
    %v796 = vunpack.c.l.s4 1934713408
    %v797 = vunpack.c.0.s8 %v796
    %v798 = vperm.slane %v790, %v797
    %v799 = vrot.slane %v786, 4
    %v800 = vsel %vm205, %v799, %v774
    %v801 = vrot.slane %v774, 4
    %v802 = vsel %vm205, %v786, %v801
    %v804 = vunpack.c.l.s4 1934713408
    %v805 = vunpack.c.0.s8 %v804
    %v806 = vperm.slane %v800, %v805
    %v808 = vunpack.c.l.s4 1934713408
    %v809 = vunpack.c.0.s8 %v808
    %v810 = vperm.slane %v802, %v809
    %v811 = vrot.slane %v794, 4
    %v812 = vsel %vm205, 0.0, %v811
    %v813 = vrot.slane %v798, 4
    %v814 = vsel %vm205, 0.0, %v813
    %v815 = vrot.slane %v806, 4
    %v816 = vsel %vm205, 0.0, %v815
    %v817 = vrot.slane %v810, 4
    %v818 = vsel %vm205, 0.0, %v817
    %v819 = vsel %vm205, %v757, %v738
    %v821 = vunpack.c.l.s4 1983009808
    %v822 = vunpack.c.0.s8 %v821
    %v823 = vperm.slane %v819, %v822
    %v824 = vrot.slane %v758, 4
    %v825 = vsel %vm205, %v824, %v756
    %v827 = vunpack.c.l.s4 1983009808
    %v828 = vunpack.c.0.s8 %v827
    %v829 = vperm.slane %v825, %v828
    %v830 = vsel %vm205, %v761, %v750
    %v832 = vunpack.c.l.s4 1983009808
    %v833 = vunpack.c.0.s8 %v832
    %v834 = vperm.slane %v830, %v833
    %v835 = vrot.slane %v762, 4
    %v836 = vsel %vm205, %v835, %v760
    %v838 = vunpack.c.l.s4 1983009808
    %v839 = vunpack.c.0.s8 %v838
    %v840 = vperm.slane %v836, %v839
    %v841 = vrot.slane %v829, 4
    %v842 = vsel %vm205, %v841, %v823
    %v843 = vrot.slane %v823, 4
    %v844 = vsel %vm205, %v829, %v843
    %v846 = vunpack.c.l.s4 1934713408
    %v847 = vunpack.c.0.s8 %v846
    %v848 = vperm.slane %v842, %v847
    %v850 = vunpack.c.l.s4 1934713408
    %v851 = vunpack.c.0.s8 %v850
    %v852 = vperm.slane %v844, %v851
    %v853 = vrot.slane %v840, 4
    %v854 = vsel %vm205, %v853, %v834
    %v855 = vrot.slane %v834, 4
    %v856 = vsel %vm205, %v840, %v855
    %v858 = vunpack.c.l.s4 1934713408
    %v859 = vunpack.c.0.s8 %v858
    %v860 = vperm.slane %v854, %v859
    %v862 = vunpack.c.l.s4 1934713408
    %v863 = vunpack.c.0.s8 %v862
    %v864 = vperm.slane %v856, %v863
    %v865 = vrot.slane %v860, 4
    %v866 = vsel %vm205, %v865, %v848
    %v867 = vrot.slane %v848, 4
    %v868 = vsel %vm205, %v860, %v867
    %v869 = vrot.slane %v864, 4
    %v870 = vsel %vm205, %v869, %v852
    %v871 = vrot.slane %v852, 4
    %v872 = vsel %vm205, %v864, %v871
    %v873 = vsel %vm205, %v813, %v794
    %v875 = vunpack.c.l.s4 1983009808
    %v876 = vunpack.c.0.s8 %v875
    %v877 = vperm.slane %v873, %v876
    %v878 = vrot.slane %v814, 4
    %v879 = vsel %vm205, %v878, %v812
    %v881 = vunpack.c.l.s4 1983009808
    %v882 = vunpack.c.0.s8 %v881
    %v883 = vperm.slane %v879, %v882
    %v884 = vsel %vm205, %v817, %v806
    %v886 = vunpack.c.l.s4 1983009808
    %v887 = vunpack.c.0.s8 %v886
    %v888 = vperm.slane %v884, %v887
    %v889 = vrot.slane %v818, 4
    %v890 = vsel %vm205, %v889, %v816
    %v892 = vunpack.c.l.s4 1983009808
    %v893 = vunpack.c.0.s8 %v892
    %v894 = vperm.slane %v890, %v893
    %v895 = vrot.slane %v883, 4
    %v896 = vsel %vm205, %v895, %v877
    %v897 = vrot.slane %v877, 4
    %v898 = vsel %vm205, %v883, %v897
    %v900 = vunpack.c.l.s4 1934713408
    %v901 = vunpack.c.0.s8 %v900
    %v902 = vperm.slane %v896, %v901
    %v904 = vunpack.c.l.s4 1934713408
    %v905 = vunpack.c.0.s8 %v904
    %v906 = vperm.slane %v898, %v905
    %v907 = vrot.slane %v894, 4
    %v908 = vsel %vm205, %v907, %v888
    %v909 = vrot.slane %v888, 4
    %v910 = vsel %vm205, %v894, %v909
    %v912 = vunpack.c.l.s4 1934713408
    %v913 = vunpack.c.0.s8 %v912
    %v914 = vperm.slane %v908, %v913
    %v916 = vunpack.c.l.s4 1934713408
    %v917 = vunpack.c.0.s8 %v916
    %v918 = vperm.slane %v910, %v917
    %v919 = vrot.slane %v914, 4
    %v920 = vsel %vm205, %v919, %v902
    %v921 = vrot.slane %v902, 4
    %v922 = vsel %vm205, %v914, %v921
    %v923 = vrot.slane %v918, 4
    %v924 = vsel %vm205, %v923, %v906
    %v925 = vrot.slane %v906, 4
    %v926 = vsel %vm205, %v918, %v925
    %vm927 = vcmask 64512
    %v929 = vsel %vm927, %v364, 0
    %v932 = vsel %vm927, %v622, 0
    %934 = vmatpush.xpose.msra.mxu0 0.0
    %935 = vmatpush.xpose.msra.mxu0 0.0
    %936 = vmatpush.xpose.msra.mxu0 0.0
    %937 = vmatpush.xpose.msra.mxu0 0.0
    %938 = vmatpush.xpose.msra.mxu0 0.0
    %939 = vmatpush.xpose.msra.mxu0 0.0
    %940 = vmatpush.xpose.msra.mxu0 0.0
    %941 = vmatpush.xpose.msra.mxu0 0.0
    %942 = vmatpush.xpose.msra.mxu0 0.0
    %943 = vmatpush.xpose.msra.mxu0 0.0
    %944 = vmatpush.xpose.msra.mxu0 0.0
    %945 = vmatpush.xpose.msra.mxu0 0.0
    %946 = vmatpush.xpose.msra.mxu0 0.0
    %947 = vmatpush.xpose.msra.mxu0 0.0
    %948 = vmatpush.xpose.msra.mxu0 0.0
    %949 = vmatpush.xpose.msra.mxu0 %v932
    %950 = vmatmul.f32.gmra.mxu0 %v929
    %v951 = vpop.f32.mrf.mxu0
    %v952 = vadd.f32 0.0, %v951
    %953 = vdwg.mxu0
    %v955 = vsel %vm927, %v366, 0
    %v958 = vsel %vm927, %v624, 0
    %960 = vmatpush.xpose.msra.mxu0 0.0
    %961 = vmatpush.xpose.msra.mxu0 0.0
    %962 = vmatpush.xpose.msra.mxu0 0.0
    %963 = vmatpush.xpose.msra.mxu0 0.0
    %964 = vmatpush.xpose.msra.mxu0 0.0
    %965 = vmatpush.xpose.msra.mxu0 0.0
    %966 = vmatpush.xpose.msra.mxu0 0.0
    %967 = vmatpush.xpose.msra.mxu0 0.0
    %968 = vmatpush.xpose.msra.mxu0 0.0
    %969 = vmatpush.xpose.msra.mxu0 0.0
    %970 = vmatpush.xpose.msra.mxu0 0.0
    %971 = vmatpush.xpose.msra.mxu0 0.0
    %972 = vmatpush.xpose.msra.mxu0 0.0
    %973 = vmatpush.xpose.msra.mxu0 0.0
    %974 = vmatpush.xpose.msra.mxu0 0.0
    %975 = vmatpush.xpose.msra.mxu0 %v958
    %976 = vmatmul.f32.gmra.mxu0 %v955
    %v977 = vpop.f32.mrf.mxu0
    %v978 = vadd.f32 0.0, %v977
    %979 = vdwg.mxu0
    %v981 = vsel %vm927, %v368, 0
    %v984 = vsel %vm927, %v626, 0
    %986 = vmatpush.xpose.msra.mxu0 0.0
    %987 = vmatpush.xpose.msra.mxu0 0.0
    %988 = vmatpush.xpose.msra.mxu0 0.0
    %989 = vmatpush.xpose.msra.mxu0 0.0
    %990 = vmatpush.xpose.msra.mxu0 0.0
    %991 = vmatpush.xpose.msra.mxu0 0.0
    %992 = vmatpush.xpose.msra.mxu0 0.0
    %993 = vmatpush.xpose.msra.mxu0 0.0
    %994 = vmatpush.xpose.msra.mxu0 0.0
    %995 = vmatpush.xpose.msra.mxu0 0.0
    %996 = vmatpush.xpose.msra.mxu0 0.0
    %997 = vmatpush.xpose.msra.mxu0 0.0
    %998 = vmatpush.xpose.msra.mxu0 0.0
    %999 = vmatpush.xpose.msra.mxu0 0.0
    %1000 = vmatpush.xpose.msra.mxu0 0.0
    %1001 = vmatpush.xpose.msra.mxu0 %v984
    %1002 = vmatmul.f32.gmra.mxu0 %v981
    %v1003 = vpop.f32.mrf.mxu0
    %v1004 = vadd.f32 0.0, %v1003
    %1005 = vdwg.mxu0
    %v1007 = vsel %vm927, %v370, 0
    %v1010 = vsel %vm927, %v628, 0
    %1012 = vmatpush.xpose.msra.mxu0 0.0
    %1013 = vmatpush.xpose.msra.mxu0 0.0
    %1014 = vmatpush.xpose.msra.mxu0 0.0
    %1015 = vmatpush.xpose.msra.mxu0 0.0
    %1016 = vmatpush.xpose.msra.mxu0 0.0
    %1017 = vmatpush.xpose.msra.mxu0 0.0
    %1018 = vmatpush.xpose.msra.mxu0 0.0
    %1019 = vmatpush.xpose.msra.mxu0 0.0
    %1020 = vmatpush.xpose.msra.mxu0 0.0
    %1021 = vmatpush.xpose.msra.mxu0 0.0
    %1022 = vmatpush.xpose.msra.mxu0 0.0
    %1023 = vmatpush.xpose.msra.mxu0 0.0
    %1024 = vmatpush.xpose.msra.mxu0 0.0
    %1025 = vmatpush.xpose.msra.mxu0 0.0
    %1026 = vmatpush.xpose.msra.mxu0 0.0
    %1027 = vmatpush.xpose.msra.mxu0 %v1010
    %1028 = vmatmul.f32.gmra.mxu0 %v1007
    %v1029 = vpop.f32.mrf.mxu0
    %v1030 = vadd.f32 0.0, %v1029
    %1031 = vdwg.mxu0
    %v1033 = vsel %vm927, %v418, 0
    %v1036 = vsel %vm927, %v676, 0
    %1038 = vmatpush.xpose.msra.mxu0 0.0
    %1039 = vmatpush.xpose.msra.mxu0 0.0
    %1040 = vmatpush.xpose.msra.mxu0 0.0
    %1041 = vmatpush.xpose.msra.mxu0 0.0
    %1042 = vmatpush.xpose.msra.mxu0 0.0
    %1043 = vmatpush.xpose.msra.mxu0 0.0
    %1044 = vmatpush.xpose.msra.mxu0 0.0
    %1045 = vmatpush.xpose.msra.mxu0 0.0
    %1046 = vmatpush.xpose.msra.mxu0 0.0
    %1047 = vmatpush.xpose.msra.mxu0 0.0
    %1048 = vmatpush.xpose.msra.mxu0 0.0
    %1049 = vmatpush.xpose.msra.mxu0 0.0
    %1050 = vmatpush.xpose.msra.mxu0 0.0
    %1051 = vmatpush.xpose.msra.mxu0 0.0
    %1052 = vmatpush.xpose.msra.mxu0 0.0
    %1053 = vmatpush.xpose.msra.mxu0 %v1036
    %1054 = vmatmul.f32.gmra.mxu0 %v1033
    %v1055 = vpop.f32.mrf.mxu0
    %v1056 = vadd.f32 0.0, %v1055
    %1057 = vdwg.mxu0
    %v1059 = vsel %vm927, %v420, 0
    %v1062 = vsel %vm927, %v678, 0
    %1064 = vmatpush.xpose.msra.mxu0 0.0
    %1065 = vmatpush.xpose.msra.mxu0 0.0
    %1066 = vmatpush.xpose.msra.mxu0 0.0
    %1067 = vmatpush.xpose.msra.mxu0 0.0
    %1068 = vmatpush.xpose.msra.mxu0 0.0
    %1069 = vmatpush.xpose.msra.mxu0 0.0
    %1070 = vmatpush.xpose.msra.mxu0 0.0
    %1071 = vmatpush.xpose.msra.mxu0 0.0
    %1072 = vmatpush.xpose.msra.mxu0 0.0
    %1073 = vmatpush.xpose.msra.mxu0 0.0
    %1074 = vmatpush.xpose.msra.mxu0 0.0
    %1075 = vmatpush.xpose.msra.mxu0 0.0
    %1076 = vmatpush.xpose.msra.mxu0 0.0
    %1077 = vmatpush.xpose.msra.mxu0 0.0
    %1078 = vmatpush.xpose.msra.mxu0 0.0
    %1079 = vmatpush.xpose.msra.mxu0 %v1062
    %1080 = vmatmul.f32.gmra.mxu0 %v1059
    %v1081 = vpop.f32.mrf.mxu0
    %v1082 = vadd.f32 0.0, %v1081
    %1083 = vdwg.mxu0
    %v1085 = vsel %vm927, %v422, 0
    %v1088 = vsel %vm927, %v680, 0
    %1090 = vmatpush.xpose.msra.mxu0 0.0
    %1091 = vmatpush.xpose.msra.mxu0 0.0
    %1092 = vmatpush.xpose.msra.mxu0 0.0
    %1093 = vmatpush.xpose.msra.mxu0 0.0
    %1094 = vmatpush.xpose.msra.mxu0 0.0
    %1095 = vmatpush.xpose.msra.mxu0 0.0
    %1096 = vmatpush.xpose.msra.mxu0 0.0
    %1097 = vmatpush.xpose.msra.mxu0 0.0
    %1098 = vmatpush.xpose.msra.mxu0 0.0
    %1099 = vmatpush.xpose.msra.mxu0 0.0
    %1100 = vmatpush.xpose.msra.mxu0 0.0
    %1101 = vmatpush.xpose.msra.mxu0 0.0
    %1102 = vmatpush.xpose.msra.mxu0 0.0
    %1103 = vmatpush.xpose.msra.mxu0 0.0
    %1104 = vmatpush.xpose.msra.mxu0 0.0
    %1105 = vmatpush.xpose.msra.mxu0 %v1088
    %1106 = vmatmul.f32.gmra.mxu0 %v1085
    %v1107 = vpop.f32.mrf.mxu0
    %v1108 = vadd.f32 0.0, %v1107
    %1109 = vdwg.mxu0
    %v1111 = vsel %vm927, %v424, 0
    %v1114 = vsel %vm927, %v682, 0
    %1116 = vmatpush.xpose.msra.mxu0 0.0
    %1117 = vmatpush.xpose.msra.mxu0 0.0
    %1118 = vmatpush.xpose.msra.mxu0 0.0
    %1119 = vmatpush.xpose.msra.mxu0 0.0
    %1120 = vmatpush.xpose.msra.mxu0 0.0
    %1121 = vmatpush.xpose.msra.mxu0 0.0
    %1122 = vmatpush.xpose.msra.mxu0 0.0
    %1123 = vmatpush.xpose.msra.mxu0 0.0
    %1124 = vmatpush.xpose.msra.mxu0 0.0
    %1125 = vmatpush.xpose.msra.mxu0 0.0
    %1126 = vmatpush.xpose.msra.mxu0 0.0
    %1127 = vmatpush.xpose.msra.mxu0 0.0
    %1128 = vmatpush.xpose.msra.mxu0 0.0
    %1129 = vmatpush.xpose.msra.mxu0 0.0
    %1130 = vmatpush.xpose.msra.mxu0 0.0
    %1131 = vmatpush.xpose.msra.mxu0 %v1114
    %1132 = vmatmul.f32.gmra.mxu0 %v1111
    %v1133 = vpop.f32.mrf.mxu0
    %v1134 = vadd.f32 0.0, %v1133
    %1135 = vdwg.mxu0
    %v1136 = vsel %vm927, %v952, -inf
    %1137 = vmax.xlane.f32.xlu0 %v1136
    %v1138 = vpop.xlane.xlu0 %1137
    %v1139 = vsel %vm927, %v978, -inf
    %1140 = vmax.xlane.f32.xlu0 %v1139
    %v1141 = vpop.xlane.xlu0 %1140
    %v1142 = vsel %vm927, %v1004, -inf
    %1143 = vmax.xlane.f32.xlu0 %v1142
    %v1144 = vpop.xlane.xlu0 %1143
    %v1145 = vsel %vm927, %v1030, -inf
    %1146 = vmax.xlane.f32.xlu0 %v1145
    %v1147 = vpop.xlane.xlu0 %1146
    %v1148 = vsel %vm927, %v1056, -inf
    %1149 = vmax.xlane.f32.xlu0 %v1148
    %v1150 = vpop.xlane.xlu0 %1149
    %v1151 = vsel %vm927, %v1082, -inf
    %1152 = vmax.xlane.f32.xlu0 %v1151
    %v1153 = vpop.xlane.xlu0 %1152
    %v1154 = vsel %vm927, %v1108, -inf
    %1155 = vmax.xlane.f32.xlu0 %v1154
    %v1156 = vpop.xlane.xlu0 %1155
    %v1157 = vsel %vm927, %v1134, -inf
    %1158 = vmax.xlane.f32.xlu0 %v1157
    %v1159 = vpop.xlane.xlu0 %1158
    %v1160 = vsub.f32 %v952, %v1138
    %v1161 = vsub.f32 %v978, %v1141
    %v1162 = vsub.f32 %v1004, %v1144
    %v1163 = vsub.f32 %v1030, %v1147
    %v1164 = vsub.f32 %v1056, %v1150
    %v1165 = vsub.f32 %v1082, %v1153
    %v1166 = vsub.f32 %v1108, %v1156
    %v1167 = vsub.f32 %v1134, %v1159
    %v1168 = vmul.f32 %v1160, 1.442695
    %v1169 = vpow.pop %v1168
    %v1170 = vmul.f32 %v1161, 1.442695
    %v1171 = vpow.pop %v1170
    %v1172 = vmul.f32 %v1162, 1.442695
    %v1173 = vpow.pop %v1172
    %v1174 = vmul.f32 %v1163, 1.442695
    %v1175 = vpow.pop %v1174
    %v1176 = vmul.f32 %v1164, 1.442695
    %v1177 = vpow.pop %v1176
    %v1178 = vmul.f32 %v1165, 1.442695
    %v1179 = vpow.pop %v1178
    %v1180 = vmul.f32 %v1166, 1.442695
    %v1181 = vpow.pop %v1180
    %v1182 = vmul.f32 %v1167, 1.442695
    %v1183 = vpow.pop %v1182
    %v1184 = vsel %vm927, %v1169, 0.0
    %1185 = vadd.xlane.f32.xlu0 %v1184
    %v1186 = vpop.xlane.xlu0 %1185
    %v1187 = vsel %vm927, %v1171, 0.0
    %1188 = vadd.xlane.f32.xlu0 %v1187
    %v1189 = vpop.xlane.xlu0 %1188
    %v1190 = vsel %vm927, %v1173, 0.0
    %1191 = vadd.xlane.f32.xlu0 %v1190
    %v1192 = vpop.xlane.xlu0 %1191
    %v1193 = vsel %vm927, %v1175, 0.0
    %1194 = vadd.xlane.f32.xlu0 %v1193
    %v1195 = vpop.xlane.xlu0 %1194
    %v1196 = vsel %vm927, %v1177, 0.0
    %1197 = vadd.xlane.f32.xlu0 %v1196
    %v1198 = vpop.xlane.xlu0 %1197
    %v1199 = vsel %vm927, %v1179, 0.0
    %1200 = vadd.xlane.f32.xlu0 %v1199
    %v1201 = vpop.xlane.xlu0 %1200
    %v1202 = vsel %vm927, %v1181, 0.0
    %1203 = vadd.xlane.f32.xlu0 %v1202
    %v1204 = vpop.xlane.xlu0 %1203
    %v1205 = vsel %vm927, %v1183, 0.0
    %1206 = vadd.xlane.f32.xlu0 %v1205
    %v1207 = vpop.xlane.xlu0 %1206
    %v1208 = vrcp.pop %v1186
    %v1209 = vrcp.pop %v1189
    %v1210 = vrcp.pop %v1192
    %v1211 = vrcp.pop %v1195
    %v1212 = vrcp.pop %v1198
    %v1213 = vrcp.pop %v1201
    %v1214 = vrcp.pop %v1204
    %v1215 = vrcp.pop %v1207
    %v1216 = vmul.f32 %v1169, %v1208
    %v1217 = vmul.f32 %v1171, %v1209
    %v1218 = vmul.f32 %v1173, %v1210
    %v1219 = vmul.f32 %v1175, %v1211
    %v1220 = vmul.f32 %v1177, %v1212
    %v1221 = vmul.f32 %v1179, %v1213
    %v1222 = vmul.f32 %v1181, %v1214
    %v1223 = vmul.f32 %v1183, %v1215
    %v1225 = vsel %vm927, %v1216, 0
    %1227 = vmatpush.msra.mxu0 0.0
    %1228 = vmatpush.msra.mxu0 0.0
    %1229 = vmatpush.msra.mxu0 0.0
    %1230 = vmatpush.msra.mxu0 0.0
    %1231 = vmatpush.msra.mxu0 0.0
    %1232 = vmatpush.msra.mxu0 0.0
    %1233 = vmatpush.msra.mxu0 0.0
    %1234 = vmatpush.msra.mxu0 0.0
    %1235 = vmatpush.msra.mxu0 0.0
    %1236 = vmatpush.msra.mxu0 0.0
    %1237 = vmatpush.msra.mxu0 0.0
    %1238 = vmatpush.msra.mxu0 0.0
    %1239 = vmatpush.msra.mxu0 0.0
    %1240 = vmatpush.msra.mxu0 0.0
    %1241 = vmatpush.msra.mxu0 0.0
    %1242 = vmatpush.msra.mxu0 %v866
    %1243 = vmatmul.f32.gmra.mxu0 %v1225
    %v1244 = vpop.f32.mrf.mxu0
    %v1245 = vadd.f32 0.0, %v1244
    %1246 = vdwg.mxu0
    %v1248 = vsel %vm927, %v1217, 0
    %1250 = vmatpush.msra.mxu0 0.0
    %1251 = vmatpush.msra.mxu0 0.0
    %1252 = vmatpush.msra.mxu0 0.0
    %1253 = vmatpush.msra.mxu0 0.0
    %1254 = vmatpush.msra.mxu0 0.0
    %1255 = vmatpush.msra.mxu0 0.0
    %1256 = vmatpush.msra.mxu0 0.0
    %1257 = vmatpush.msra.mxu0 0.0
    %1258 = vmatpush.msra.mxu0 0.0
    %1259 = vmatpush.msra.mxu0 0.0
    %1260 = vmatpush.msra.mxu0 0.0
    %1261 = vmatpush.msra.mxu0 0.0
    %1262 = vmatpush.msra.mxu0 0.0
    %1263 = vmatpush.msra.mxu0 0.0
    %1264 = vmatpush.msra.mxu0 0.0
    %1265 = vmatpush.msra.mxu0 %v868
    %1266 = vmatmul.f32.gmra.mxu0 %v1248
    %v1267 = vpop.f32.mrf.mxu0
    %v1268 = vadd.f32 0.0, %v1267
    %1269 = vdwg.mxu0
    %v1271 = vsel %vm927, %v1218, 0
    %1273 = vmatpush.msra.mxu0 0.0
    %1274 = vmatpush.msra.mxu0 0.0
    %1275 = vmatpush.msra.mxu0 0.0
    %1276 = vmatpush.msra.mxu0 0.0
    %1277 = vmatpush.msra.mxu0 0.0
    %1278 = vmatpush.msra.mxu0 0.0
    %1279 = vmatpush.msra.mxu0 0.0
    %1280 = vmatpush.msra.mxu0 0.0
    %1281 = vmatpush.msra.mxu0 0.0
    %1282 = vmatpush.msra.mxu0 0.0
    %1283 = vmatpush.msra.mxu0 0.0
    %1284 = vmatpush.msra.mxu0 0.0
    %1285 = vmatpush.msra.mxu0 0.0
    %1286 = vmatpush.msra.mxu0 0.0
    %1287 = vmatpush.msra.mxu0 0.0
    %1288 = vmatpush.msra.mxu0 %v870
    %1289 = vmatmul.f32.gmra.mxu0 %v1271
    %v1290 = vpop.f32.mrf.mxu0
    %v1291 = vadd.f32 0.0, %v1290
    %1292 = vdwg.mxu0
    %v1294 = vsel %vm927, %v1219, 0
    %1296 = vmatpush.msra.mxu0 0.0
    %1297 = vmatpush.msra.mxu0 0.0
    %1298 = vmatpush.msra.mxu0 0.0
    %1299 = vmatpush.msra.mxu0 0.0
    %1300 = vmatpush.msra.mxu0 0.0
    %1301 = vmatpush.msra.mxu0 0.0
    %1302 = vmatpush.msra.mxu0 0.0
    %1303 = vmatpush.msra.mxu0 0.0
    %1304 = vmatpush.msra.mxu0 0.0
    %1305 = vmatpush.msra.mxu0 0.0
    %1306 = vmatpush.msra.mxu0 0.0
    %1307 = vmatpush.msra.mxu0 0.0
    %1308 = vmatpush.msra.mxu0 0.0
    %1309 = vmatpush.msra.mxu0 0.0
    %1310 = vmatpush.msra.mxu0 0.0
    %1311 = vmatpush.msra.mxu0 %v872
    %1312 = vmatmul.f32.gmra.mxu0 %v1294
    %v1313 = vpop.f32.mrf.mxu0
    %v1314 = vadd.f32 0.0, %v1313
    %1315 = vdwg.mxu0
    %v1317 = vsel %vm927, %v1220, 0
    %1319 = vmatpush.msra.mxu0 0.0
    %1320 = vmatpush.msra.mxu0 0.0
    %1321 = vmatpush.msra.mxu0 0.0
    %1322 = vmatpush.msra.mxu0 0.0
    %1323 = vmatpush.msra.mxu0 0.0
    %1324 = vmatpush.msra.mxu0 0.0
    %1325 = vmatpush.msra.mxu0 0.0
    %1326 = vmatpush.msra.mxu0 0.0
    %1327 = vmatpush.msra.mxu0 0.0
    %1328 = vmatpush.msra.mxu0 0.0
    %1329 = vmatpush.msra.mxu0 0.0
    %1330 = vmatpush.msra.mxu0 0.0
    %1331 = vmatpush.msra.mxu0 0.0
    %1332 = vmatpush.msra.mxu0 0.0
    %1333 = vmatpush.msra.mxu0 0.0
    %1334 = vmatpush.msra.mxu0 %v920
    %1335 = vmatmul.f32.gmra.mxu0 %v1317
    %v1336 = vpop.f32.mrf.mxu0
    %v1337 = vadd.f32 0.0, %v1336
    %1338 = vdwg.mxu0
    %v1340 = vsel %vm927, %v1221, 0
    %1342 = vmatpush.msra.mxu0 0.0
    %1343 = vmatpush.msra.mxu0 0.0
    %1344 = vmatpush.msra.mxu0 0.0
    %1345 = vmatpush.msra.mxu0 0.0
    %1346 = vmatpush.msra.mxu0 0.0
    %1347 = vmatpush.msra.mxu0 0.0
    %1348 = vmatpush.msra.mxu0 0.0
    %1349 = vmatpush.msra.mxu0 0.0
    %1350 = vmatpush.msra.mxu0 0.0
    %1351 = vmatpush.msra.mxu0 0.0
    %1352 = vmatpush.msra.mxu0 0.0
    %1353 = vmatpush.msra.mxu0 0.0
    %1354 = vmatpush.msra.mxu0 0.0
    %1355 = vmatpush.msra.mxu0 0.0
    %1356 = vmatpush.msra.mxu0 0.0
    %1357 = vmatpush.msra.mxu0 %v922
    %1358 = vmatmul.f32.gmra.mxu0 %v1340
    %v1359 = vpop.f32.mrf.mxu0
    %v1360 = vadd.f32 0.0, %v1359
    %1361 = vdwg.mxu0
    %v1363 = vsel %vm927, %v1222, 0
    %1365 = vmatpush.msra.mxu0 0.0
    %1366 = vmatpush.msra.mxu0 0.0
    %1367 = vmatpush.msra.mxu0 0.0
    %1368 = vmatpush.msra.mxu0 0.0
    %1369 = vmatpush.msra.mxu0 0.0
    %1370 = vmatpush.msra.mxu0 0.0
    %1371 = vmatpush.msra.mxu0 0.0
    %1372 = vmatpush.msra.mxu0 0.0
    %1373 = vmatpush.msra.mxu0 0.0
    %1374 = vmatpush.msra.mxu0 0.0
    %1375 = vmatpush.msra.mxu0 0.0
    %1376 = vmatpush.msra.mxu0 0.0
    %1377 = vmatpush.msra.mxu0 0.0
    %1378 = vmatpush.msra.mxu0 0.0
    %1379 = vmatpush.msra.mxu0 0.0
    %1380 = vmatpush.msra.mxu0 %v924
    %1381 = vmatmul.f32.gmra.mxu0 %v1363
    %v1382 = vpop.f32.mrf.mxu0
    %v1383 = vadd.f32 0.0, %v1382
    %1384 = vdwg.mxu0
    %v1386 = vsel %vm927, %v1223, 0
    %1388 = vmatpush.msra.mxu0 0.0
    %1389 = vmatpush.msra.mxu0 0.0
    %1390 = vmatpush.msra.mxu0 0.0
    %1391 = vmatpush.msra.mxu0 0.0
    %1392 = vmatpush.msra.mxu0 0.0
    %1393 = vmatpush.msra.mxu0 0.0
    %1394 = vmatpush.msra.mxu0 0.0
    %1395 = vmatpush.msra.mxu0 0.0
    %1396 = vmatpush.msra.mxu0 0.0
    %1397 = vmatpush.msra.mxu0 0.0
    %1398 = vmatpush.msra.mxu0 0.0
    %1399 = vmatpush.msra.mxu0 0.0
    %1400 = vmatpush.msra.mxu0 0.0
    %1401 = vmatpush.msra.mxu0 0.0
    %1402 = vmatpush.msra.mxu0 0.0
    %1403 = vmatpush.msra.mxu0 %v926
    %1404 = vmatmul.f32.gmra.mxu0 %v1386
    %v1405 = vpop.f32.mrf.mxu0
    %v1406 = vadd.f32 0.0, %v1405
    %1407 = vdwg.mxu0
    %v1408 = vrot.slane %v1291, 4
    %v1409 = vsel %vm205, %v1408, %v1245
    %v1410 = vrot.slane %v1245, 4
    %v1411 = vsel %vm205, %v1291, %v1410
    %v1413 = vunpack.c.l.s4 1983009808
    %v1414 = vunpack.c.0.s8 %v1413
    %v1415 = vperm.slane %v1409, %v1414
    %v1417 = vunpack.c.l.s4 1983009808
    %v1418 = vunpack.c.0.s8 %v1417
    %v1419 = vperm.slane %v1411, %v1418
    %v1420 = vrot.slane %v1314, 4
    %v1421 = vsel %vm205, %v1420, %v1268
    %v1422 = vrot.slane %v1268, 4
    %v1423 = vsel %vm205, %v1314, %v1422
    %v1425 = vunpack.c.l.s4 1983009808
    %v1426 = vunpack.c.0.s8 %v1425
    %v1427 = vperm.slane %v1421, %v1426
    %v1429 = vunpack.c.l.s4 1983009808
    %v1430 = vunpack.c.0.s8 %v1429
    %v1431 = vperm.slane %v1423, %v1430
    %v1432 = vrot.slane %v1427, 4
    %v1433 = vsel %vm205, %v1432, %v1415
    %v1434 = vrot.slane %v1415, 4
    %v1435 = vsel %vm205, %v1427, %v1434
    %v1437 = vunpack.c.l.s4 1934713408
    %v1438 = vunpack.c.0.s8 %v1437
    %v1439 = vperm.slane %v1433, %v1438
    %v1441 = vunpack.c.l.s4 1934713408
    %v1442 = vunpack.c.0.s8 %v1441
    %v1443 = vperm.slane %v1435, %v1442
    %v1444 = vrot.slane %v1431, 4
    %v1445 = vsel %vm205, %v1444, %v1419
    %v1446 = vrot.slane %v1419, 4
    %v1447 = vsel %vm205, %v1431, %v1446
    %v1449 = vunpack.c.l.s4 1934713408
    %v1450 = vunpack.c.0.s8 %v1449
    %v1451 = vperm.slane %v1445, %v1450
    %v1453 = vunpack.c.l.s4 1934713408
    %v1454 = vunpack.c.0.s8 %v1453
    %v1455 = vperm.slane %v1447, %v1454
    %v1456 = vrot.slane %v1439, 4
    %v1457 = vsel %vm205, 0.0, %v1456
    %v1458 = vrot.slane %v1443, 4
    %v1459 = vsel %vm205, 0.0, %v1458
    %v1460 = vrot.slane %v1451, 4
    %v1461 = vsel %vm205, 0.0, %v1460
    %v1462 = vrot.slane %v1455, 4
    %v1463 = vsel %vm205, 0.0, %v1462
    %v1464 = vrot.slane %v1383, 4
    %v1465 = vsel %vm205, %v1464, %v1337
    %v1466 = vrot.slane %v1337, 4
    %v1467 = vsel %vm205, %v1383, %v1466
    %v1469 = vunpack.c.l.s4 1983009808
    %v1470 = vunpack.c.0.s8 %v1469
    %v1471 = vperm.slane %v1465, %v1470
    %v1473 = vunpack.c.l.s4 1983009808
    %v1474 = vunpack.c.0.s8 %v1473
    %v1475 = vperm.slane %v1467, %v1474
    %v1476 = vrot.slane %v1406, 4
    %v1477 = vsel %vm205, %v1476, %v1360
    %v1478 = vrot.slane %v1360, 4
    %v1479 = vsel %vm205, %v1406, %v1478
    %v1481 = vunpack.c.l.s4 1983009808
    %v1482 = vunpack.c.0.s8 %v1481
    %v1483 = vperm.slane %v1477, %v1482
    %v1485 = vunpack.c.l.s4 1983009808
    %v1486 = vunpack.c.0.s8 %v1485
    %v1487 = vperm.slane %v1479, %v1486
    %v1488 = vrot.slane %v1483, 4
    %v1489 = vsel %vm205, %v1488, %v1471
    %v1490 = vrot.slane %v1471, 4
    %v1491 = vsel %vm205, %v1483, %v1490
    %v1493 = vunpack.c.l.s4 1934713408
    %v1494 = vunpack.c.0.s8 %v1493
    %v1495 = vperm.slane %v1489, %v1494
    %v1497 = vunpack.c.l.s4 1934713408
    %v1498 = vunpack.c.0.s8 %v1497
    %v1499 = vperm.slane %v1491, %v1498
    %v1500 = vrot.slane %v1487, 4
    %v1501 = vsel %vm205, %v1500, %v1475
    %v1502 = vrot.slane %v1475, 4
    %v1503 = vsel %vm205, %v1487, %v1502
    %v1505 = vunpack.c.l.s4 1934713408
    %v1506 = vunpack.c.0.s8 %v1505
    %v1507 = vperm.slane %v1501, %v1506
    %v1509 = vunpack.c.l.s4 1934713408
    %v1510 = vunpack.c.0.s8 %v1509
    %v1511 = vperm.slane %v1503, %v1510
    %v1512 = vrot.slane %v1495, 4
    %v1513 = vsel %vm205, 0.0, %v1512
    %v1514 = vrot.slane %v1499, 4
    %v1515 = vsel %vm205, 0.0, %v1514
    %v1516 = vrot.slane %v1507, 4
    %v1517 = vsel %vm205, 0.0, %v1516
    %v1518 = vrot.slane %v1511, 4
    %v1519 = vsel %vm205, 0.0, %v1518
    %v1520 = vsel %vm205, %v1458, %v1439
    %v1522 = vunpack.c.l.s4 1983009808
    %v1523 = vunpack.c.0.s8 %v1522
    %v1524 = vperm.slane %v1520, %v1523
    %v1525 = vrot.slane %v1459, 4
    %v1526 = vsel %vm205, %v1525, %v1457
    %v1528 = vunpack.c.l.s4 1983009808
    %v1529 = vunpack.c.0.s8 %v1528
    %v1530 = vperm.slane %v1526, %v1529
    %v1531 = vsel %vm205, %v1462, %v1451
    %v1533 = vunpack.c.l.s4 1983009808
    %v1534 = vunpack.c.0.s8 %v1533
    %v1535 = vperm.slane %v1531, %v1534
    %v1536 = vrot.slane %v1463, 4
    %v1537 = vsel %vm205, %v1536, %v1461
    %v1539 = vunpack.c.l.s4 1983009808
    %v1540 = vunpack.c.0.s8 %v1539
    %v1541 = vperm.slane %v1537, %v1540
    %v1542 = vrot.slane %v1530, 4
    %v1543 = vsel %vm205, %v1542, %v1524
    %v1544 = vrot.slane %v1524, 4
    %v1545 = vsel %vm205, %v1530, %v1544
    %v1547 = vunpack.c.l.s4 1934713408
    %v1548 = vunpack.c.0.s8 %v1547
    %v1549 = vperm.slane %v1543, %v1548
    %v1551 = vunpack.c.l.s4 1934713408
    %v1552 = vunpack.c.0.s8 %v1551
    %v1553 = vperm.slane %v1545, %v1552
    %v1554 = vrot.slane %v1541, 4
    %v1555 = vsel %vm205, %v1554, %v1535
    %v1556 = vrot.slane %v1535, 4
    %v1557 = vsel %vm205, %v1541, %v1556
    %v1559 = vunpack.c.l.s4 1934713408
    %v1560 = vunpack.c.0.s8 %v1559
    %v1561 = vperm.slane %v1555, %v1560
    %v1563 = vunpack.c.l.s4 1934713408
    %v1564 = vunpack.c.0.s8 %v1563
    %v1565 = vperm.slane %v1557, %v1564
    %v1566 = vrot.slane %v1561, 4
    %v1567 = vsel %vm205, %v1566, %v1549
    %v1568 = vrot.slane %v1549, 4
    %v1569 = vsel %vm205, %v1561, %v1568
    %v1570 = vrot.slane %v1565, 4
    %v1571 = vsel %vm205, %v1570, %v1553
    %v1572 = vrot.slane %v1553, 4
    %v1573 = vsel %vm205, %v1565, %v1572
    %v1574 = vsel %vm205, %v1514, %v1495
    %v1576 = vunpack.c.l.s4 1983009808
    %v1577 = vunpack.c.0.s8 %v1576
    %v1578 = vperm.slane %v1574, %v1577
    %v1579 = vrot.slane %v1515, 4
    %v1580 = vsel %vm205, %v1579, %v1513
    %v1582 = vunpack.c.l.s4 1983009808
    %v1583 = vunpack.c.0.s8 %v1582
    %v1584 = vperm.slane %v1580, %v1583
    %v1585 = vsel %vm205, %v1518, %v1507
    %v1587 = vunpack.c.l.s4 1983009808
    %v1588 = vunpack.c.0.s8 %v1587
    %v1589 = vperm.slane %v1585, %v1588
    %v1590 = vrot.slane %v1519, 4
    %v1591 = vsel %vm205, %v1590, %v1517
    %v1593 = vunpack.c.l.s4 1983009808
    %v1594 = vunpack.c.0.s8 %v1593
    %v1595 = vperm.slane %v1591, %v1594
    %v1596 = vrot.slane %v1584, 4
    %v1597 = vsel %vm205, %v1596, %v1578
    %v1598 = vrot.slane %v1578, 4
    %v1599 = vsel %vm205, %v1584, %v1598
    %v1601 = vunpack.c.l.s4 1934713408
    %v1602 = vunpack.c.0.s8 %v1601
    %v1603 = vperm.slane %v1597, %v1602
    %v1605 = vunpack.c.l.s4 1934713408
    %v1606 = vunpack.c.0.s8 %v1605
    %v1607 = vperm.slane %v1599, %v1606
    %v1608 = vrot.slane %v1595, 4
    %v1609 = vsel %vm205, %v1608, %v1589
    %v1610 = vrot.slane %v1589, 4
    %v1611 = vsel %vm205, %v1595, %v1610
    %v1613 = vunpack.c.l.s4 1934713408
    %v1614 = vunpack.c.0.s8 %v1613
    %v1615 = vperm.slane %v1609, %v1614
    %v1617 = vunpack.c.l.s4 1934713408
    %v1618 = vunpack.c.0.s8 %v1617
    %v1619 = vperm.slane %v1611, %v1618
    %v1620 = vrot.slane %v1615, 4
    %v1621 = vsel %vm205, %v1620, %v1603
    %v1622 = vrot.slane %v1603, 4
    %v1623 = vsel %vm205, %v1615, %v1622
    %v1624 = vrot.slane %v1619, 4
    %v1625 = vsel %vm205, %v1624, %v1607
    %v1626 = vrot.slane %v1607, 4
    %v1627 = vsel %vm205, %v1619, %v1626
    %1630 = vrot.lane.b32.xlu0 %v1569, 8
    %v1631 = vpop.permute.xlu0 %1630
    %1632 = vrot.lane.b32.xlu0 %v1623, 8
    %v1633 = vpop.permute.xlu0 %1632
    %1638 = vrot.lane.b32.xlu0 %v1571, 16
    %v1639 = vpop.permute.xlu0 %1638
    %1640 = vrot.lane.b32.xlu0 %v1625, 16
    %v1641 = vpop.permute.xlu0 %1640
    %1646 = vrot.lane.b32.xlu0 %v1573, 24
    %v1647 = vpop.permute.xlu0 %1646
    %1648 = vrot.lane.b32.xlu0 %v1627, 24
    %v1649 = vpop.permute.xlu0 %1648
    %v1652 = vsel %vm927, %v1567, %v1631
    %v1653 = vsel %vm927, %v1621, %v1633
    %vm1654 = vcmask 130048
    %v1655 = vsel %vm1654, %v1652, %v1639
    %v1656 = vsel %vm1654, %v1653, %v1641
    %vm1657 = vcmask 195584
    %v1658 = vsel %vm1657, %v1655, %v1647
    %v1659 = vsel %vm1657, %v1656, %v1649
    %v1660 = vperm.slane %v86, 0
    %v1662 = vsel %vm90, %v1658, 0
    %v1665 = vsel %vm90, %v1659, 0
    %1667 = vmatpush.msra.mxu0 0.0
    %1668 = vmatpush.msra.mxu0 0.0
    %1669 = vmatpush.msra.mxu0 0.0
    %1670 = vmatpush.msra.mxu0 0.0
    %1671 = vmatpush.msra.mxu0 0.0
    %1672 = vmatpush.msra.mxu0 0.0
    %1673 = vmatpush.msra.mxu0 0.0
    %1674 = vmatpush.msra.mxu0 0.0
    %1675 = vmatpush.msra.mxu0 0.0
    %1676 = vmatpush.msra.mxu0 0.0
    %1677 = vmatpush.msra.mxu0 0.0
    %1678 = vmatpush.msra.mxu0 0.0
    %1679 = vmatpush.msra.mxu0 %v69
    %1680 = vmatpush.msra.mxu0 %v68
    %1681 = vmatpush.msra.mxu0 %v67
    %1682 = vmatpush.msra.mxu0 %v66
    %1683 = vmatmul.f32.gmra.mxu0 %v1662
    %v1684 = vpop.f32.mrf.mxu0
    %v1685 = vadd.f32 %v1660, %v1684
    %1686 = vmatmul.f32.gmra.mxu0 %v1665
    %v1687 = vpop.f32.mrf.mxu0
    %v1688 = vadd.f32 %v1660, %v1687
    %1689 = vdwg.mxu0
    %v1690 = vadd.f32 %v1685, %v60
    %v1691 = vadd.f32 %v1688, %v61
    %v1692 = vsel %vm90, %v1690, 0.0
    %1693 = vadd.xlane.f32.xlu0 %v1692
    %v1694 = vpop.xlane.xlu0 %1693
    %v1695 = vsel %vm90, %v1691, 0.0
    %1696 = vadd.xlane.f32.xlu0 %v1695
    %v1697 = vpop.xlane.xlu0 %1696
    %v1698 = vmul.f32 %v1694, %v103
    %v1699 = vmul.f32 %v1697, %v103
    %v1700 = vmul.f32 %v1690, %v1690
    %v1701 = vmul.f32 %v1691, %v1691
    %v1702 = vsel %vm90, %v1700, 0.0
    %1703 = vadd.xlane.f32.xlu0 %v1702
    %v1704 = vpop.xlane.xlu0 %1703
    %v1705 = vsel %vm90, %v1701, 0.0
    %1706 = vadd.xlane.f32.xlu0 %v1705
    %v1707 = vpop.xlane.xlu0 %1706
    %v1708 = vmul.f32 %v1704, %v103
    %v1709 = vmul.f32 %v1707, %v103
    %v1710 = vmul.f32 %v1698, %v1698
    %v1711 = vmul.f32 %v1699, %v1699
    %v1712 = vsub.f32 %v1708, %v1710
    %v1713 = vsub.f32 %v1709, %v1711
    %v1714 = vsub.f32 %v1690, %v1698
    %v1715 = vsub.f32 %v1691, %v1699
    %v1716 = vadd.f32 %v1712, 1e-05
    %v1717 = vadd.f32 %v1713, 1e-05
    %v1718 = vrsqrt.pop %v1716
    %v1719 = vmul.f32 %v1718, %v1716
    %v1720 = vmul.f32 %v1719, %v1718
    %v1721 = vmul.f32 0.5, %v1720
    %v1722 = vsub.f32 1.5, %v1721
    %v1723 = vmul.f32 %v1718, %v1722
    %vm1724 = vweird.f32 %v1716
    %vm1725 = vweird.f32 %v1718
    %vm1726 = vmor %vm1724, %vm1725
    %v1727 = vsel %vm1726, %v1718, %v1723
    %v1728 = vrsqrt.pop %v1717
    %v1729 = vmul.f32 %v1728, %v1717
    %v1730 = vmul.f32 %v1729, %v1728
    %v1731 = vmul.f32 0.5, %v1730
    %v1732 = vsub.f32 1.5, %v1731
    %v1733 = vmul.f32 %v1728, %v1732
    %vm1734 = vweird.f32 %v1717
    %vm1735 = vweird.f32 %v1728
    %vm1736 = vmor %vm1734, %vm1735
    %v1737 = vsel %vm1736, %v1728, %v1733
    %v1738 = vmul.f32 %v1714, %v1727
    %v1739 = vmul.f32 %v1715, %v1737
    %v1740 = vperm.slane %v84, 0
    %v1741 = vmul.f32 %v1738, %v1740
    %v1742 = vmul.f32 %v1739, %v1740
    %v1743 = vperm.slane %v85, 0
    %v1744 = vadd.f32 %v1741, %v1743
    %v1745 = vadd.f32 %v1742, %v1743
    %v1746 = vperm.slane %v88, 0
    %v1748 = vsel %vm90, %v1744, 0
    %v1751 = vsel %vm90, %v1745, 0
    %1753 = vmatpush.msra.mxu0 0.0
    %1754 = vmatpush.msra.mxu0 0.0
    %1755 = vmatpush.msra.mxu0 0.0
    %1756 = vmatpush.msra.mxu0 0.0
    %1757 = vmatpush.msra.mxu0 0.0
    %1758 = vmatpush.msra.mxu0 0.0
    %1759 = vmatpush.msra.mxu0 0.0
    %1760 = vmatpush.msra.mxu0 0.0
    %1761 = vmatpush.msra.mxu0 0.0
    %1762 = vmatpush.msra.mxu0 0.0
    %1763 = vmatpush.msra.mxu0 0.0
    %1764 = vmatpush.msra.mxu0 0.0
    %1765 = vmatpush.msra.mxu0 %v73
    %1766 = vmatpush.msra.mxu0 %v72
    %1767 = vmatpush.msra.mxu0 %v71
    %1768 = vmatpush.msra.mxu0 %v70
    %1769 = vmatmul.f32.gmra.mxu0 %v1748
    %v1770 = vpop.f32.mrf.mxu0
    %v1771 = vadd.f32 %v1746, %v1770
    %1772 = vmatmul.f32.gmra.mxu0 %v1751
    %v1773 = vpop.f32.mrf.mxu0
    %v1774 = vadd.f32 %v1746, %v1773
    %1775 = vdwg.mxu0
    %v1776 = vmul.f32 %v1771, 0.5
    %v1777 = vmul.f32 %v1774, 0.5
    %v1778 = vmul.f32 %v1771, 0.044715
    %v1779 = vmul.f32 %v1774, 0.044715
    %v1780 = vmul.f32 %v1778, %v1771
    %v1781 = vmul.f32 %v1779, %v1774
    %v1782 = vmul.f32 %v1780, %v1771
    %v1783 = vmul.f32 %v1781, %v1774
    %v1784 = vadd.f32 %v1771, %v1782
    %v1785 = vadd.f32 %v1774, %v1783
    %v1786 = vmul.f32 %v1784, 0.7978846
    %v1787 = vmul.f32 %v1785, 0.7978846
    %v1788 = vtanh.pop %v1786
    %v1789 = vtanh.pop %v1787
    %v1790 = vadd.f32 %v1788, 1.0
    %v1791 = vadd.f32 %v1789, 1.0
    %v1792 = vmul.f32 %v1776, %v1790
    %v1793 = vmul.f32 %v1777, %v1791
    %v1794 = vperm.slane %v87, 0
    %vm1795 = vcmask 523264
    %v1797 = vsel %vm1795, %v1792, 0
    %v1800 = vsel %vm1795, %v1793, 0
    %1802 = vmatpush.msra.mxu0 0.0
    %1803 = vmatpush.msra.mxu0 0.0
    %1804 = vmatpush.msra.mxu0 0.0
    %1805 = vmatpush.msra.mxu0 0.0
    %1806 = vmatpush.msra.mxu0 0.0
    %1807 = vmatpush.msra.mxu0 0.0
    %1808 = vmatpush.msra.mxu0 0.0
    %1809 = vmatpush.msra.mxu0 0.0
    %1810 = vmatpush.msra.mxu0 %v81
    %1811 = vmatpush.msra.mxu0 %v80
    %1812 = vmatpush.msra.mxu0 %v79
    %1813 = vmatpush.msra.mxu0 %v78
    %1814 = vmatpush.msra.mxu0 %v77
    %1815 = vmatpush.msra.mxu0 %v76
    %1816 = vmatpush.msra.mxu0 %v75
    %1817 = vmatpush.msra.mxu0 %v74
    %1818 = vmatmul.f32.gmra.mxu0 %v1797
    %v1819 = vpop.f32.mrf.mxu0
    %v1820 = vadd.f32 %v1794, %v1819
    %1821 = vmatmul.f32.gmra.mxu0 %v1800
    %v1822 = vpop.f32.mrf.mxu0
    %v1823 = vadd.f32 %v1794, %v1822
    %1824 = vdwg.mxu0
    %v1825 = vadd.f32 %v1820, %v1690
    %v1826 = vadd.f32 %v1823, %v1691
    %1827 = vst.msk [vmem:[#allocation8] sm:$0xff] %vm90, %v1825
    %1828 = vst.msk [vmem:[#allocation8 + $0x8] sm:$0xff] %vm90, %v1826
    // Predicated region
    $region26: #{tpu_custom_call.1} parent=1 // pred_check
      _
    $region27: #{tpu_custom_call.1} parent=1 // pred_check_branch
      %1830 = sbr.rel (0) target = $region29
    $region28: #{tpu_custom_call.1} parent=1 // pred_region
      %1832 = vsyncadd [#allocation4], 0
      %s1833 = sshll.u32 [#allocation8], 4
      %s1834 = int_to_ptr.vmem [resolvable:$true] %s1833
      %s1835 = sshll.u32 %s3, 4
      %s1836 = int_to_ptr.hbm [resolvable:$true] %s1835
      %1841 = dma.vmem_to_hbm [thread:$0]  %s1834, 256, %s1836, [#allocation4], 128, 128, 8
    $region29: #{tpu_custom_call.1} parent=1 // pred_fallthru
      _
    // Predicated region
    $region30: #{tpu_custom_call.1} parent=1 // pred_check
      _
    $region31: #{tpu_custom_call.1} parent=1 // pred_check_branch
      %1843 = sbr.rel (0) target = $region33
    $region32: #{tpu_custom_call.1} parent=1 // pred_region
      %1845 = dma.done [#allocation4], 256
    $region33: #{tpu_custom_call.1} parent=1 // pred_fallthru
      _
    %1846 = vsyncpa [#allocation3], 1
    %1847 = vsyncpa [#allocation6], 1
    %1848 = vsyncpa [#allocation4], 1

</llo_original>
